<compile_context>
chip_gen: v7x
topology: tpu7x:2x2x1
jax: 0.10.0
libtpu: 0.0.40
codegen_flags: <defaults>
</compile_context>

<pallas_src>
import jax
import jax.numpy as jnp
from jax import lax
from jax.experimental import pallas as pl
from jax.experimental.pallas import tpu as pltpu


def _bottleneck_kernel(
    x_ref,    # (1, TH, W, Cin) bf16  main input tile (NHWC)
    xt_ref,   # (1, 1, W, Cin)  bf16  halo row above the tile (clamped)
    xb_ref,   # (1, 1, W, Cin)  bf16  halo row below the tile (clamped)
    w1_ref,   # (Cin, P)        bf16  conv1 1x1 weight (BN1 scale folded in)
    b1_ref,   # (1, P)          f32   BN1 bias
    w2_ref,   # (3, 3P, P)      bf16  conv2 weight [ky, (kx,cin), cout], BN2 folded
    b2_ref,   # (1, P)          f32
    w3_ref,   # (P, Cout)       bf16  conv3 1x1 weight (BN3 scale folded in)
    b3_ref,   # (1, Cout)       f32
    o_ref,    # (1, TH, W, Cout) bf16
):
    _, TH, W, Cin = x_ref.shape
    P = w1_ref.shape[1]
    Cout = w3_ref.shape[1]
    rows = TH * W
    L = (TH + 2) * W            # tile rows + 1 halo row above + 1 below

    h_idx = pl.program_id(1)
    is_top = h_idx == 0
    is_bot = h_idx == pl.num_programs(1) - 1

    # Extended (halo-included) bf16 input, flattened to (L, Cin).
    x_main = x_ref[...].reshape(rows, Cin)          # bf16, also used for residual
    x_top = xt_ref[...].reshape(W, Cin)
    x_bot = xb_ref[...].reshape(W, Cin)
    x_ext = jnp.concatenate([x_top, x_main, x_bot], axis=0)      # (L, Cin) bf16

    # ---- conv1 (1x1, BN scale folded) + bias + relu ------------------------
    h1 = jnp.dot(x_ext, w1_ref[...], preferred_element_type=jnp.float32)
    h1 = jnp.maximum(h1 + b1_ref[...], 0.0)                      # (L, P) f32

    # Zero the halo rows that fall outside the image (conv2 padding=1).
    row = lax.broadcasted_iota(jnp.int32, (L, 1), 0)
    pad = jnp.logical_or(jnp.logical_and(is_top, row < W),
                         jnp.logical_and(is_bot, row >= L - W))
    h1 = jnp.where(pad, 0.0, h1)

    # ---- conv2 (3x3, stride 1, pad 1) + bias + relu ------------------------
    # kx taps folded into K: build the (L, 3P) slab [in[x-1] | in[x] | in[x+1]]
    # with sublane rolls + column masks (f32 rolls for v5e-safe lowering, cast
    # to bf16 per part), then one matmul per ky tap on row-shifted slices.
    col = row % W
    left = jnp.where(col > 0, pltpu.roll(h1, 1, 0), 0.0)         # in[y, x-1]
    right = jnp.where(col < W - 1, pltpu.roll(h1, L - 1, 0), 0.0)  # in[y, x+1]
    mid = jnp.concatenate([left.astype(jnp.bfloat16),
                           h1.astype(jnp.bfloat16),
                           right.astype(jnp.bfloat16)], axis=-1)  # (L, 3P) bf16

    # Output row y of this tile needs extended rows y, y+1, y+2 (ky = 0,1,2).
    acc = jnp.dot(mid[0:rows], w2_ref[0],
                  preferred_element_type=jnp.float32)             # ky=0 (y-1)
    acc = acc + jnp.dot(mid[W:W + rows], w2_ref[1],
                        preferred_element_type=jnp.float32)       # ky=1 (y)
    acc = acc + jnp.dot(mid[2 * W:2 * W + rows], w2_ref[2],
                        preferred_element_type=jnp.float32)       # ky=2 (y+1)
    h2 = jnp.maximum(acc + b2_ref[...], 0.0).astype(jnp.bfloat16)  # (rows, P)

    # ---- conv3 (1x1) + bias + residual add + relu --------------------------
    h3 = jnp.dot(h2, w3_ref[...], preferred_element_type=jnp.float32)
    out = jnp.maximum(h3 + b3_ref[...] + x_main.astype(jnp.float32), 0.0)

    o_ref[...] = out.reshape(1, TH, W, Cout).astype(o_ref.dtype)


def _choose_tile_h(H, W, target_rows=2048):
    """Largest divisor of H keeping TH*W rows per tile under the target."""
    for th in range(H, 0, -1):
        if H % th == 0 and th * W <= target_rows:
            return th
    return 1


def bottleneck_pallas_nhwc(x_nhwc, params, tile_h=None):
    """Steady-state entry point: NHWC in / NHWC out, bf16 activation DMA."""
    w1, b1, w2r, b2, w3, b3 = params
    N, H, W, Cin = x_nhwc.shape
    P = w1.shape[1]
    Cout = w3.shape[1]
    assert Cout == Cin, "downsample=None requires inplanes == planes * expansion"

    if x_nhwc.dtype != jnp.bfloat16:
        # Steady state the producer should already emit bf16; cast once here.
        x_nhwc = x_nhwc.astype(jnp.bfloat16)

    TH = _choose_tile_h(H, W) if tile_h is None else int(tile_h)
    assert H % TH == 0, f"tile_h={TH} must divide H={H}"
    n_h = H // TH

    def const_spec(a):
        nd = a.ndim
        return pl.BlockSpec(a.shape, lambda n, h, _nd=nd: (0,) * _nd)

    # Accurate per-tile VMEM requirement (bf16 activations, folded weights,
    # in-kernel temporaries).  Never clamp below `need` (review item 8); after
    # H-tiling this stays well under v7x's 64 MiB physical VMEM.
    bf, f4 = 2, 4
    rows = TH * W
    L = (TH + 2) * W
    in_blk = (rows + 2 * W) * Cin * bf
    out_blk = rows * Cout * bf
    w_bytes = sum(int(a.size) * a.dtype.itemsize
                  for a in (w1, b1, w2r, b2, w3, b3))
    tmp_bytes = (L * Cin * bf                       # x_ext
                 + L * P * (3 * f4 + 3 * bf)        # h1 + rolls (f32), bf16 parts
                 + L * 3 * P * bf                   # mid slab
                 + 3 * rows * 3 * P * bf            # materialized ky slices
                 + rows * (2 * P * f4 + 2 * Cout * f4 + Cin * f4))
    need = 2 * (in_blk + out_blk) + 2 * w_bytes + 2 * tmp_bytes + (2 << 20)
    vmem_limit = int(max(need, 8 << 20))

    return pl.pallas_call(
        _bottleneck_kernel,
        out_shape=jax.ShapeDtypeStruct((N, H, W, Cout), jnp.bfloat16),
        grid_spec=pltpu.PrefetchScalarGridSpec(
            num_scalar_prefetch=0,
            grid=(N, n_h),
            in_specs=[
                # main tile
                pl.BlockSpec((1, TH, W, Cin), lambda n, h: (n, h, 0, 0)),
                # 1-row halos (clamped at image boundaries; masked in-kernel)
                pl.BlockSpec((1, 1, W, Cin),
                             lambda n, h: (n, jnp.maximum(h * TH - 1, 0), 0, 0)),
                pl.BlockSpec((1, 1, W, Cin),
                             lambda n, h: (n, jnp.minimum(h * TH + TH, H - 1), 0, 0)),
                const_spec(w1), const_spec(b1),
                const_spec(w2r), const_spec(b2),
                const_spec(w3), const_spec(b3),
            ],
            out_specs=pl.BlockSpec((1, TH, W, Cout), lambda n, h: (n, h, 0, 0)),
        ),
        compiler_params=pltpu.CompilerParams(
            dimension_semantics=("parallel", "parallel"),
            vmem_limit_bytes=vmem_limit,
        ),
    )(x_nhwc, x_nhwc, x_nhwc, w1, b1, w2r, b2, w3, b3)


def bottleneck_pallas(x_nchw, params, tile_h=None):
    """PyTorch-convention convenience wrapper: NCHW in / NCHW out.

    Steady-state callers should keep activations NHWC + bf16 and call
    bottleneck_pallas_nhwc directly (saves two full HBM transpose passes on a
    memory-bound block).
    """
    x_nhwc = jnp.transpose(x_nchw, (0, 2, 3, 1))   # one-time layout transform
    out = bottleneck_pallas_nhwc(x_nhwc, params, tile_h=tile_h)
    return jnp.transpose(out, (0, 3, 1, 2))


def _fold_bn(gamma, beta, mean, var, eps=1e-5):
    scale = gamma / jnp.sqrt(var + eps)
    bias = beta - mean * scale
    return scale.astype(jnp.float32), bias[None, :].astype(jnp.float32)


def make_params(key, inplanes, planes, expansion=4):
    """Deterministic synthetic parameters in kernel layout.

    BN running stats/affine are folded: the per-channel BN scale is folded into
    the conv weights in f32 (then cast to bf16); only the bias remains as an
    epilogue term.
    """
    cout = planes * expansion
    ks = jax.random.split(key, 15)
    w1 = 0.1 * jax.random.normal(ks[0], (inplanes, planes), jnp.float32)
    w2 = 0.1 * jax.random.normal(ks[1], (3, 3, planes, planes), jnp.float32)
    w3 = 0.1 * jax.random.normal(ks[2], (planes, cout), jnp.float32)

    def bn(kg, kb, km, kv, c):
        gamma = 1.0 + 0.1 * jax.random.normal(kg, (c,), jnp.float32)
        beta = 0.1 * jax.random.normal(kb, (c,), jnp.float32)
        mean = 0.1 * jax.random.normal(km, (c,), jnp.float32)
        var = jnp.abs(jax.random.normal(kv, (c,), jnp.float32)) + 0.5
        return _fold_bn(gamma, beta, mean, var)

    s1, b1 = bn(ks[3], ks[4], ks[5], ks[6], planes)
    s2, b2 = bn(ks[7], ks[8], ks[9], ks[10], planes)
    s3, b3 = bn(ks[11], ks[12], ks[13], ks[14], cout)

    # Fold BN scale (f32) into conv weights, then cast to bf16.
    w1f = (w1 * s1).astype(jnp.bfloat16)                          # (Cin, P)
    # conv2: (ky, kx, cin, cout) * scale[cout] -> fold kx into contraction dim.
    w2f = (w2 * s2).astype(jnp.bfloat16).reshape(3, 3 * planes, planes)
    w3f = (w3 * s3).astype(jnp.bfloat16)                          # (P, Cout)
    return (w1f, b1, w2f, b2, w3f, b3)


def bottleneck_reference_nhwc(x_nhwc_bf16, params):
    """Pure-JAX NHWC reference mirroring the kernel's bf16/f32 math."""
    w1, b1, w2r, b2, w3, b3 = params
    P = w1.shape[1]
    x_bf = x_nhwc_bf16.astype(jnp.bfloat16)
    xf = x_bf.astype(jnp.float32)
    h = jnp.einsum("nhwc,cp->nhwp", x_bf, w1,
                   preferred_element_type=jnp.float32)
    h = jnp.maximum(h + b1[0], 0.0)
    w2 = w2r.reshape(3, 3, P, P)                                  # HWIO
    h = lax.conv_general_dilated(
        h.astype(jnp.bfloat16), w2, window_strides=(1, 1),
        padding=((1, 1), (1, 1)),
        dimension_numbers=("NHWC", "HWIO", "NHWC"),
        preferred_element_type=jnp.float32)
    h = jnp.maximum(h + b2[0], 0.0)
    h = jnp.einsum("nhwp,pc->nhwc", h.astype(jnp.bfloat16), w3,
                   preferred_element_type=jnp.float32)
    return jnp.maximum(h + b3[0] + xf, 0.0)


if __name__ == "__main__":
    # Small test shapes: inplanes=16, planes=4 (expansion 4 -> cout=16), 16x16.
    # NOTE: Cout=16 < 128 means masked partial stores and a 16/128-occupied lane
    # axis; real ResNet stages (C >= 128) fill the lanes / MXU properly and are
    # the shapes the tiling targets.
    N, INPLANES, PLANES, H, W = 2, 16, 4, 16, 16

    key = jax.random.PRNGKey(0)
    kx, kp = jax.random.split(key)
    x_nchw = jax.random.normal(kx, (N, INPLANES, H, W), jnp.float32)   # NCHW
    params = make_params(kp, INPLANES, PLANES)

    # Steady-state path: NHWC + bf16 activations (one-time layout/dtype change
    # done here in the harness), H-tiled with tile_h=8 so the halo logic across
    # two spatial tiles is exercised.
    x_nhwc = jnp.transpose(x_nchw, (0, 2, 3, 1)).astype(jnp.bfloat16)
    out = bottleneck_pallas_nhwc(x_nhwc, params, tile_h=8)
    out = jax.block_until_ready(out)

    ref = bottleneck_reference_nhwc(x_nhwc, params)
    assert out.shape == (N, H, W, INPLANES), out.shape
    assert out.dtype == jnp.bfloat16, out.dtype
    max_err = float(jnp.max(jnp.abs(out.astype(jnp.float32) - ref)))
    assert jnp.allclose(out.astype(jnp.float32), ref, atol=3e-2, rtol=3e-2), max_err

    # Also check the NCHW convenience wrapper (auto tile_h -> single tile path).
    out_nchw = jax.block_until_ready(bottleneck_pallas(x_nchw, params))
    ref_nchw = jnp.transpose(ref, (0, 3, 1, 2))
    assert jnp.allclose(out_nchw.astype(jnp.float32), ref_nchw,
                        atol=3e-2, rtol=3e-2)

    print("KERNEL_OK")
</pallas_src>

<mosaic_0001>
module attributes {stable_mosaic.version = 11 : i64} {
  func.func @_bottleneck_kernel(%arg0: i32, %arg1: i32, %arg2: memref<1x8x16x16xbf16, #tpu.memory_space<vmem>>, %arg3: memref<1x1x16x16xbf16, #tpu.memory_space<vmem>>, %arg4: memref<1x1x16x16xbf16, #tpu.memory_space<vmem>>, %arg5: memref<16x4xbf16, #tpu.memory_space<vmem>>, %arg6: memref<1x4xf32, #tpu.memory_space<vmem>>, %arg7: memref<3x12x4xbf16, #tpu.memory_space<vmem>>, %arg8: memref<1x4xf32, #tpu.memory_space<vmem>>, %arg9: memref<4x16xbf16, #tpu.memory_space<vmem>>, %arg10: memref<1x16xf32, #tpu.memory_space<vmem>>, %arg11: memref<1x8x16x16xbf16, #tpu.memory_space<vmem>>) attributes {dimension_semantics = [#tpu.dimension_semantics<parallel>, #tpu.dimension_semantics<parallel>], iteration_bounds = array<i64: 2, 2>, scalar_prefetch = 0 : i64, scratch_operands = 0 : i64, tpu.core_type = #tpu.core_type<tc>, window_params = [{transform_indices = @transform_0, window_bounds = array<i64: 1, 8, 16, 16>}, {transform_indices = @transform_1, window_bounds = array<i64: 1, 1, 16, 16>}, {transform_indices = @transform_2, window_bounds = array<i64: 1, 1, 16, 16>}, {pipeline_mode = #tpu.pipeline_mode<synchronous>, transform_indices = @transform_3, window_bounds = array<i64: 16, 4>}, {pipeline_mode = #tpu.pipeline_mode<synchronous>, transform_indices = @transform_4, window_bounds = array<i64: 1, 4>}, {pipeline_mode = #tpu.pipeline_mode<synchronous>, transform_indices = @transform_5, window_bounds = array<i64: 3, 12, 4>}, {pipeline_mode = #tpu.pipeline_mode<synchronous>, transform_indices = @transform_6, window_bounds = array<i64: 1, 4>}, {pipeline_mode = #tpu.pipeline_mode<synchronous>, transform_indices = @transform_7, window_bounds = array<i64: 4, 16>}, {pipeline_mode = #tpu.pipeline_mode<synchronous>, transform_indices = @transform_8, window_bounds = array<i64: 1, 16>}, {transform_indices = @transform_9, window_bounds = array<i64: 1, 8, 16, 16>}]} {
    %c0_i32 = arith.constant 0 : i32
    %0 = arith.cmpi eq, %arg1, %c0_i32 : i32
    %c1_i32 = arith.constant 1 : i32
    %1 = arith.cmpi eq, %arg1, %c1_i32 : i32
    %c0 = arith.constant 0 : index
    %c0_0 = arith.constant 0 : index
    %c0_1 = arith.constant 0 : index
    %c0_2 = arith.constant 0 : index
    %2 = vector.load %arg2[%c0, %c0_0, %c0_1, %c0_2] : memref<1x8x16x16xbf16, #tpu.memory_space<vmem>>, vector<1x8x16x16xbf16>
    %3 = vector.shape_cast %2 : vector<1x8x16x16xbf16> to vector<128x16xbf16>
    %c0_3 = arith.constant 0 : index
    %c0_4 = arith.constant 0 : index
    %c0_5 = arith.constant 0 : index
    %c0_6 = arith.constant 0 : index
    %4 = vector.load %arg3[%c0_3, %c0_4, %c0_5, %c0_6] : memref<1x1x16x16xbf16, #tpu.memory_space<vmem>>, vector<1x1x16x16xbf16>
    %5 = vector.shape_cast %4 : vector<1x1x16x16xbf16> to vector<16x16xbf16>
    %c0_7 = arith.constant 0 : index
    %c0_8 = arith.constant 0 : index
    %c0_9 = arith.constant 0 : index
    %c0_10 = arith.constant 0 : index
    %6 = vector.load %arg4[%c0_7, %c0_8, %c0_9, %c0_10] : memref<1x1x16x16xbf16, #tpu.memory_space<vmem>>, vector<1x1x16x16xbf16>
    %7 = vector.shape_cast %6 : vector<1x1x16x16xbf16> to vector<16x16xbf16>
    %8 = tpu.concatenate %5, %3, %7 in 0 : vector<16x16xbf16>, vector<128x16xbf16>, vector<16x16xbf16> -> vector<160x16xbf16>
    %c0_11 = arith.constant 0 : index
    %c0_12 = arith.constant 0 : index
    %9 = vector.load %arg5[%c0_11, %c0_12] : memref<16x4xbf16, #tpu.memory_space<vmem>>, vector<16x4xbf16>
    %cst = arith.constant dense<0.000000e+00> : vector<160x4xf32>
    %10 = tpu.matmul %8, %9, %cst {dimension_numbers = #tpu.dot_dimension_numbers<[1], [0], [0], [1], [0, 0, 1, 1], [], []>} : vector<160x16xbf16>, vector<16x4xbf16>, vector<160x4xf32> -> vector<160x4xf32>
    %c0_13 = arith.constant 0 : index
    %c0_14 = arith.constant 0 : index
    %11 = vector.load %arg6[%c0_13, %c0_14] : memref<1x4xf32, #tpu.memory_space<vmem>>, vector<1x4xf32>
    %12 = vector.broadcast %11 : vector<1x4xf32> to vector<160x4xf32>
    %13 = arith.addf %10, %12 : vector<160x4xf32>
    %cst_15 = arith.constant 0.000000e+00 : f32
    %14 = vector.broadcast %cst_15 : f32 to vector<160x4xf32>
    %15 = arith.maximumf %13, %14 : vector<160x4xf32>
    %16 = tpu.iota {dimensions = array<i32: 0>} : vector<160x1xi32>
    %c16_i32 = arith.constant 16 : i32
    %17 = vector.broadcast %c16_i32 : i32 to vector<160x1xi32>
    %18 = arith.cmpi slt, %16, %17 : vector<160x1xi32>
    %19 = vector.broadcast %0 : i1 to vector<160x1xi1>
    %20 = arith.andi %19, %18 : vector<160x1xi1>
    %c144_i32 = arith.constant 144 : i32
    %21 = vector.broadcast %c144_i32 : i32 to vector<160x1xi32>
    %22 = arith.cmpi sge, %16, %21 : vector<160x1xi32>
    %23 = vector.broadcast %1 : i1 to vector<160x1xi1>
    %24 = arith.andi %23, %22 : vector<160x1xi1>
    %25 = arith.ori %20, %24 : vector<160x1xi1>
    %cst_16 = arith.constant 0.000000e+00 : f32
    %26 = vector.shape_cast %25 : vector<160x1xi1> to vector<160x1xi1>
    %27 = vector.broadcast %26 : vector<160x1xi1> to vector<160x4xi1>
    %28 = vector.broadcast %cst_16 : f32 to vector<160x4xf32>
    %29 = arith.select %27, %28, %15 : vector<160x4xi1>, vector<160x4xf32>
    %c16_i32_17 = arith.constant 16 : i32
    %c0_i32_18 = arith.constant 0 : i32
    %30 = arith.cmpi eq, %c16_i32_17, %c0_i32_18 : i32
    %c1_i32_19 = arith.constant 1 : i32
    %31 = arith.select %30, %c1_i32_19, %c16_i32_17 : i32
    %32 = vector.broadcast %31 : i32 to vector<160x1xi32>
    %33 = arith.remsi %16, %32 : vector<160x1xi32>
    %c0_i32_20 = arith.constant 0 : i32
    %34 = vector.broadcast %c0_i32_20 : i32 to vector<160x1xi32>
    %35 = arith.cmpi ne, %33, %34 : vector<160x1xi32>
    %c0_i32_21 = arith.constant 0 : i32
    %36 = vector.broadcast %c0_i32_21 : i32 to vector<160x1xi32>
    %37 = arith.cmpi slt, %33, %36 : vector<160x1xi32>
    %c0_i32_22 = arith.constant 0 : i32
    %38 = arith.cmpi slt, %31, %c0_i32_22 : i32
    %39 = vector.broadcast %38 : i1 to vector<160x1xi1>
    %40 = vector.broadcast %39 : vector<160x1xi1> to vector<160x1xi1>
    %41 = arith.xori %37, %40 : vector<160x1xi1>
    %42 = arith.andi %41, %35 : vector<160x1xi1>
    %43 = vector.broadcast %31 : i32 to vector<160x1xi32>
    %44 = arith.addi %33, %43 : vector<160x1xi32>
    %45 = arith.select %42, %44, %33 : vector<160x1xi1>, vector<160x1xi32>
    %c0_i32_23 = arith.constant 0 : i32
    %46 = vector.broadcast %c0_i32_23 : i32 to vector<160x1xi32>
    %47 = arith.cmpi sgt, %45, %46 : vector<160x1xi32>
    %c1_i32_24 = arith.constant 1 : i32
    %48 = tpu.dynamic_rotate %29 by %c1_i32_24 dim 0 : vector<160x4xf32>, i32 -> vector<160x4xf32>
    %cst_25 = arith.constant 0.000000e+00 : f32
    %49 = vector.shape_cast %47 : vector<160x1xi1> to vector<160x1xi1>
    %50 = vector.broadcast %49 : vector<160x1xi1> to vector<160x4xi1>
    %51 = vector.broadcast %cst_25 : f32 to vector<160x4xf32>
    %52 = arith.select %50, %48, %51 : vector<160x4xi1>, vector<160x4xf32>
    %c15_i32 = arith.constant 15 : i32
    %53 = vector.broadcast %c15_i32 : i32 to vector<160x1xi32>
    %54 = arith.cmpi slt, %45, %53 : vector<160x1xi32>
    %c159_i32 = arith.constant 159 : i32
    %55 = tpu.dynamic_rotate %29 by %c159_i32 dim 0 : vector<160x4xf32>, i32 -> vector<160x4xf32>
    %cst_26 = arith.constant 0.000000e+00 : f32
    %56 = vector.shape_cast %54 : vector<160x1xi1> to vector<160x1xi1>
    %57 = vector.broadcast %56 : vector<160x1xi1> to vector<160x4xi1>
    %58 = vector.broadcast %cst_26 : f32 to vector<160x4xf32>
    %59 = arith.select %57, %55, %58 : vector<160x4xi1>, vector<160x4xf32>
    %60 = arith.truncf %52 : vector<160x4xf32> to vector<160x4xbf16>
    %61 = arith.truncf %29 : vector<160x4xf32> to vector<160x4xbf16>
    %62 = arith.truncf %59 : vector<160x4xf32> to vector<160x4xbf16>
    %63 = tpu.concatenate %60, %61, %62 in 1 : vector<160x4xbf16>, vector<160x4xbf16>, vector<160x4xbf16> -> vector<160x12xbf16>
    %64 = vector.extract_strided_slice %63 {offsets = [0, 0], sizes = [128, 12], strides = [1, 1]} : vector<160x12xbf16> to vector<128x12xbf16>
    %c0_27 = arith.constant 0 : index
    %c0_28 = arith.constant 0 : index
    %c0_29 = arith.constant 0 : index
    %65 = vector.load %arg7[%c0_27, %c0_28, %c0_29] : memref<3x12x4xbf16, #tpu.memory_space<vmem>>, vector<1x12x4xbf16>
    %66 = vector.shape_cast %65 : vector<1x12x4xbf16> to vector<12x4xbf16>
    %cst_30 = arith.constant dense<0.000000e+00> : vector<128x4xf32>
    %67 = tpu.matmul %64, %66, %cst_30 {dimension_numbers = #tpu.dot_dimension_numbers<[1], [0], [0], [1], [0, 0, 1, 1], [], []>} : vector<128x12xbf16>, vector<12x4xbf16>, vector<128x4xf32> -> vector<128x4xf32>
    %68 = vector.extract_strided_slice %63 {offsets = [16, 0], sizes = [128, 12], strides = [1, 1]} : vector<160x12xbf16> to vector<128x12xbf16>
    %c1 = arith.constant 1 : index
    %c0_31 = arith.constant 0 : index
    %c0_32 = arith.constant 0 : index
    %69 = vector.load %arg7[%c1, %c0_31, %c0_32] : memref<3x12x4xbf16, #tpu.memory_space<vmem>>, vector<1x12x4xbf16>
    %70 = vector.shape_cast %69 : vector<1x12x4xbf16> to vector<12x4xbf16>
    %cst_33 = arith.constant dense<0.000000e+00> : vector<128x4xf32>
    %71 = tpu.matmul %68, %70, %cst_33 {dimension_numbers = #tpu.dot_dimension_numbers<[1], [0], [0], [1], [0, 0, 1, 1], [], []>} : vector<128x12xbf16>, vector<12x4xbf16>, vector<128x4xf32> -> vector<128x4xf32>
    %72 = arith.addf %67, %71 : vector<128x4xf32>
    %73 = vector.extract_strided_slice %63 {offsets = [32, 0], sizes = [128, 12], strides = [1, 1]} : vector<160x12xbf16> to vector<128x12xbf16>
    %c2 = arith.constant 2 : index
    %c0_34 = arith.constant 0 : index
    %c0_35 = arith.constant 0 : index
    %74 = vector.load %arg7[%c2, %c0_34, %c0_35] : memref<3x12x4xbf16, #tpu.memory_space<vmem>>, vector<1x12x4xbf16>
    %75 = vector.shape_cast %74 : vector<1x12x4xbf16> to vector<12x4xbf16>
    %cst_36 = arith.constant dense<0.000000e+00> : vector<128x4xf32>
    %76 = tpu.matmul %73, %75, %cst_36 {dimension_numbers = #tpu.dot_dimension_numbers<[1], [0], [0], [1], [0, 0, 1, 1], [], []>} : vector<128x12xbf16>, vector<12x4xbf16>, vector<128x4xf32> -> vector<128x4xf32>
    %77 = arith.addf %72, %76 : vector<128x4xf32>
    %c0_37 = arith.constant 0 : index
    %c0_38 = arith.constant 0 : index
    %78 = vector.load %arg8[%c0_37, %c0_38] : memref<1x4xf32, #tpu.memory_space<vmem>>, vector<1x4xf32>
    %79 = vector.broadcast %78 : vector<1x4xf32> to vector<128x4xf32>
    %80 = arith.addf %77, %79 : vector<128x4xf32>
    %cst_39 = arith.constant 0.000000e+00 : f32
    %81 = vector.broadcast %cst_39 : f32 to vector<128x4xf32>
    %82 = arith.maximumf %80, %81 : vector<128x4xf32>
    %83 = arith.truncf %82 : vector<128x4xf32> to vector<128x4xbf16>
    %c0_40 = arith.constant 0 : index
    %c0_41 = arith.constant 0 : index
    %84 = vector.load %arg9[%c0_40, %c0_41] : memref<4x16xbf16, #tpu.memory_space<vmem>>, vector<4x16xbf16>
    %cst_42 = arith.constant dense<0.000000e+00> : vector<128x16xf32>
    %85 = tpu.matmul %83, %84, %cst_42 {dimension_numbers = #tpu.dot_dimension_numbers<[1], [0], [0], [1], [0, 0, 1, 1], [], []>} : vector<128x4xbf16>, vector<4x16xbf16>, vector<128x16xf32> -> vector<128x16xf32>
    %c0_43 = arith.constant 0 : index
    %c0_44 = arith.constant 0 : index
    %86 = vector.load %arg10[%c0_43, %c0_44] : memref<1x16xf32, #tpu.memory_space<vmem>>, vector<1x16xf32>
    %87 = vector.broadcast %86 : vector<1x16xf32> to vector<128x16xf32>
    %88 = arith.addf %85, %87 : vector<128x16xf32>
    %89 = arith.extf %3 : vector<128x16xbf16> to vector<128x16xf32>
    %90 = arith.addf %88, %89 : vector<128x16xf32>
    %cst_45 = arith.constant 0.000000e+00 : f32
    %91 = vector.broadcast %cst_45 : f32 to vector<128x16xf32>
    %92 = arith.maximumf %90, %91 : vector<128x16xf32>
    %93 = vector.shape_cast %92 : vector<128x16xf32> to vector<1x8x16x16xf32>
    %94 = arith.truncf %93 : vector<1x8x16x16xf32> to vector<1x8x16x16xbf16>
    %c0_46 = arith.constant 0 : index
    %c0_47 = arith.constant 0 : index
    %c0_48 = arith.constant 0 : index
    %c0_49 = arith.constant 0 : index
    %95 = vector.load %arg11[%c0_46, %c0_47, %c0_48, %c0_49] : memref<1x8x16x16xbf16, #tpu.memory_space<vmem>>, vector<1x8x16x16xbf16>
    tpu.vector_store %arg11[%c0_46, %c0_47, %c0_48, %c0_49], %94 {strides = array<i32>} : memref<1x8x16x16xbf16, #tpu.memory_space<vmem>>, vector<1x8x16x16xbf16>,
    return
  }
  func.func @transform_0(%arg0: i32, %arg1: i32) -> (i32, i32, i32, i32) {
    %c0_i32 = arith.constant 0 : i32
    %c0_i32_0 = arith.constant 0 : i32
    %c0_i32_1 = arith.constant 0 : i32
    return %arg0, %arg1, %c0_i32, %c0_i32_0 : i32, i32, i32, i32
  }
  func.func @transform_1(%arg0: i32, %arg1: i32) -> (i32, i32, i32, i32) {
    %c8_i32 = arith.constant 8 : i32
    %0 = arith.muli %arg1, %c8_i32 : i32
    %c1_i32 = arith.constant 1 : i32
    %1 = arith.subi %0, %c1_i32 : i32
    %c0_i32 = arith.constant 0 : i32
    %2 = arith.maxsi %1, %c0_i32 : i32
    %c0_i32_0 = arith.constant 0 : i32
    %c0_i32_1 = arith.constant 0 : i32
    %c0_i32_2 = arith.constant 0 : i32
    return %arg0, %2, %c0_i32_0, %c0_i32_1 : i32, i32, i32, i32
  }
  func.func @transform_2(%arg0: i32, %arg1: i32) -> (i32, i32, i32, i32) {
    %c8_i32 = arith.constant 8 : i32
    %0 = arith.muli %arg1, %c8_i32 : i32
    %c8_i32_0 = arith.constant 8 : i32
    %1 = arith.addi %0, %c8_i32_0 : i32
    %c15_i32 = arith.constant 15 : i32
    %2 = arith.minsi %1, %c15_i32 : i32
    %c0_i32 = arith.constant 0 : i32
    %c0_i32_1 = arith.constant 0 : i32
    %c0_i32_2 = arith.constant 0 : i32
    return %arg0, %2, %c0_i32, %c0_i32_1 : i32, i32, i32, i32
  }
  func.func @transform_3(%arg0: i32, %arg1: i32) -> (i32, i32) {
    %c0_i32 = arith.constant 0 : i32
    %c0_i32_0 = arith.constant 0 : i32
    %c0_i32_1 = arith.constant 0 : i32
    return %c0_i32, %c0_i32_0 : i32, i32
  }
  func.func @transform_4(%arg0: i32, %arg1: i32) -> (i32, i32) {
    %c0_i32 = arith.constant 0 : i32
    %c0_i32_0 = arith.constant 0 : i32
    %c0_i32_1 = arith.constant 0 : i32
    return %c0_i32, %c0_i32_0 : i32, i32
  }
  func.func @transform_5(%arg0: i32, %arg1: i32) -> (i32, i32, i32) {
    %c0_i32 = arith.constant 0 : i32
    %c0_i32_0 = arith.constant 0 : i32
    %c0_i32_1 = arith.constant 0 : i32
    %c0_i32_2 = arith.constant 0 : i32
    return %c0_i32, %c0_i32_0, %c0_i32_1 : i32, i32, i32
  }
  func.func @transform_6(%arg0: i32, %arg1: i32) -> (i32, i32) {
    %c0_i32 = arith.constant 0 : i32
    %c0_i32_0 = arith.constant 0 : i32
    %c0_i32_1 = arith.constant 0 : i32
    return %c0_i32, %c0_i32_0 : i32, i32
  }
  func.func @transform_7(%arg0: i32, %arg1: i32) -> (i32, i32) {
    %c0_i32 = arith.constant 0 : i32
    %c0_i32_0 = arith.constant 0 : i32
    %c0_i32_1 = arith.constant 0 : i32
    return %c0_i32, %c0_i32_0 : i32, i32
  }
  func.func @transform_8(%arg0: i32, %arg1: i32) -> (i32, i32) {
    %c0_i32 = arith.constant 0 : i32
    %c0_i32_0 = arith.constant 0 : i32
    %c0_i32_1 = arith.constant 0 : i32
    return %c0_i32, %c0_i32_0 : i32, i32
  }
  func.func @transform_9(%arg0: i32, %arg1: i32) -> (i32, i32, i32, i32) {
    %c0_i32 = arith.constant 0 : i32
    %c0_i32_0 = arith.constant 0 : i32
    %c0_i32_1 = arith.constant 0 : i32
    return %arg0, %arg1, %c0_i32, %c0_i32_0 : i32, i32, i32, i32
  }
}

</mosaic_0001>

<llo_original>
// kernel: tpu_custom_call.1
$region0: #{tpu_custom_call.1}
  #allocation0 [shape = 'u32[]', space=smem, size = 0x4, offset = 0x4, fixed_abs, tag = 'smem constant byte address 0x4 - core index']
  #allocation1 [shape = 'u32[144,128]{1,0:T(1,128)}', space=vmem, size = 0x12000, scoped, tag = 'internal scratch']
  %s0 = inlined_call_operand.hbm [shape: bf16[2,16,16,16], index: 0, kind: input, shape index: {}]
  %s1 = inlined_call_operand.hbm [shape: bf16[2,16,16,16], index: 1, kind: input, shape index: {}]
  %s2 = inlined_call_operand.hbm [shape: bf16[2,16,16,16], index: 2, kind: input, shape index: {}]
  %s3 = inlined_call_operand.vmem [shape: bf16[16,4], index: 3, kind: input, shape index: {}]
  %s4 = inlined_call_operand.vmem [shape: f32[1,4], index: 4, kind: input, shape index: {}]
  %s5 = inlined_call_operand.vmem [shape: bf16[3,12,4], index: 5, kind: input, shape index: {}]
  %s6 = inlined_call_operand.vmem [shape: f32[1,4], index: 6, kind: input, shape index: {}]
  %s7 = inlined_call_operand.vmem [shape: bf16[4,16], index: 7, kind: input, shape index: {}]
  %s8 = inlined_call_operand.vmem [shape: f32[1,16], index: 8, kind: input, shape index: {}]
  %s9 = inlined_call_operand.hbm [shape: bf16[2,16,16,16], index: 9, kind: output, shape index: {}]
  %s10 = sld [smem:[#allocation0]]
  $region81: #{tpu_custom_call.1} parent=0
    _
  %s12 = ssub.s32 1, %s10
  %s13 = scalar_select 0, %s12, %s10
  $region1: #{tpu_custom_call.1} parent=0
    #allocation2 [shape = 'u8[65536]{0}', space=vmem, size = 0x10000, scoped, tag = 'input window, operand 0']
    #allocation3 [shape = 's32[2]{0}', space=sflag, size = 0x8, scoped, tag = 'scoped memory for tpu_custom_call.1']
    #allocation4 [shape = 's32[2]{0}', space=sflag, size = 0x8, scoped, tag = 'scoped memory for tpu_custom_call.1']
    #allocation5 [shape = 'u8[8192]{0}', space=vmem, size = 0x2000, scoped, tag = 'input window, operand 1']
    #allocation6 [shape = 's32[2]{0}', space=sflag, size = 0x8, scoped, tag = 'scoped memory for tpu_custom_call.1']
    #allocation7 [shape = 'u8[8192]{0}', space=vmem, size = 0x2000, scoped, tag = 'input window, operand 2']
    #allocation8 [shape = 'u8[65536]{0}', space=vmem, size = 0x10000, scoped, tag = 'output window, operand 0']
    %14 = vsyncpa [#allocation3], 0
    %s15 = scalar_lea.sflag [#allocation3], 1
    %16 = vsyncpa %s15, 0
    %17 = vsyncpa [#allocation6], 0
    %s18 = scalar_lea.sflag [#allocation6], 1
    %19 = vsyncpa %s18, 0
    %20 = vsyncpa [#allocation4], 0
    %s21 = scalar_lea.sflag [#allocation4], 1
    %22 = vsyncpa %s21, 0
    loop: start=0, step=1, limit=6
    $region2: #{tpu_custom_call.1} parent=1 // loop_pre_header
      _
    $region3: #{tpu_custom_call.1} parent=1 // loop_header
      %s24 = sphi 0, %s28
      %p25 = scmp.ge.s32.totalorder %s24, 6
      %s31 = sphi 0, %s43
      %s32 = sphi 0, %s39
      %s33 = sphi 0, %s31
      %s34 = sphi 0, %s32
      %s35 = sphi 0, %s33
      %s36 = sphi 0, %s34
      %s48 = sphi 0, %s50
      %s51 = sphi 0, %s48
      %s52 = sphi 0, %s51
      %s68 = sphi 0, %s52
      %s84 = sphi 0, %s86
      %s87 = sphi 0, %s84
      %s88 = sphi 0, %s87
      %s104 = sphi 0, %s88
      %s120 = sphi 0, %s122
      %s123 = sphi 0, %s120
      %s124 = sphi 0, %s123
      %s140 = sphi 0, %s124
      %s144 = sphi 0, %s144
      %s146 = sphi 0, %s144
      %s147 = sphi 0, %s146
      %s161 = sphi 0, %s147
      %s165 = sphi 0, %s165
      %s167 = sphi 0, %s165
      %s168 = sphi 0, %s167
      %s182 = sphi 0, %s168
      %s186 = sphi 0, %s186
      %s188 = sphi 0, %s186
      %s189 = sphi 0, %s188
      %s203 = sphi 0, %s189
      %s207 = sphi 0, %s207
      %s209 = sphi 0, %s207
      %s210 = sphi 0, %s209
      %s224 = sphi 0, %s210
      %s228 = sphi 0, %s228
      %s230 = sphi 0, %s228
      %s231 = sphi 0, %s230
      %s245 = sphi 0, %s231
      %s249 = sphi 0, %s249
      %s251 = sphi 0, %s249
      %s252 = sphi 0, %s251
      %s266 = sphi 0, %s252
      %s274 = sphi 0, %s276
      %s277 = sphi 0, %s274
      %s278 = sphi 0, %s277
      %s294 = sphi 0, %s278
    $region4: #{tpu_custom_call.1} parent=1 // loop_header_branch
      %27 = sbr.rel (%p25) target = $region8
    $region5: #{tpu_custom_call.1} parent=1 // loop_body
      %s29 = ssub.s32 %s24, 1
      %s30 = ssub.s32 %s24, 2
      %s37 = sadd.s32 1, %s32
      %p38 = scmp.ge.s32.totalorder %s37, 2
      %s39 = scalar_select %p38, 0, %s37
      %s40 = sadd.s32 1, %s31
      %s41 = scalar_select %p38, %s40, %s31
      %p42 = scmp.ge.s32.totalorder %s41, 2
      %s43 = scalar_select %p42, 0, %s41
      %s44 = ssub.s32 %s31, %s43
      %s45 = ssub.s32 %s32, %s39
      %s46 = sor.u32 %s44, %s45
      %p47 = scmp.eq.s32.totalorder %s46, 0
      %s49 = sadd.s32 %s48, 1
      %s50 = scalar_select %p47, %s48, %s49
      %p53 = pneg %p47
      %p54 = scmp.eq.s32.totalorder %s24, 3
      %p55 = por %p53, %p54
      %p56 = scmp.ne.s32.totalorder %s48, %s51
      %p57 = scmp.eq.s32.totalorder %s24, 0
      %p58 = por %p56, %p57
      %p59 = scmp.ne.s32.totalorder %s48, %s51
      %p60 = scmp.eq.s32.totalorder %s29, 3
      %p61 = por %p59, %p60
      %p62 = scmp.ne.s32.totalorder %s51, %s52
      %p63 = scmp.eq.s32.totalorder %s29, 0
      %p64 = por %p62, %p63
      %p65 = scmp.ne.s32.totalorder %s51, %s52
      %p66 = scmp.eq.s32.totalorder %s30, 3
      %p67 = por %p65, %p66
      %p69 = scmp.ne.s32.totalorder %s52, %s68
      %p70 = scmp.eq.s32.totalorder %s30, 0
      %p71 = por %p69, %p70
      %s72 = smul.u32 %s32, 8
      %s73 = ssub.s32 %s72, 1
      %p74 = scmp.gt.s32.totalorder %s73, 0
      %s75 = scalar_select %p74, %s73, 0
      %s76 = smul.u32 %s39, 8
      %s77 = ssub.s32 %s76, 1
      %p78 = scmp.gt.s32.totalorder %s77, 0
      %s79 = scalar_select %p78, %s77, 0
      %s80 = ssub.s32 %s31, %s43
      %s81 = ssub.s32 %s75, %s79
      %s82 = sor.u32 %s80, %s81
      %p83 = scmp.eq.s32.totalorder %s82, 0
      %s85 = sadd.s32 %s84, 1
      %s86 = scalar_select %p83, %s84, %s85
      %p89 = pneg %p83
      %p90 = scmp.eq.s32.totalorder %s24, 3
      %p91 = por %p89, %p90
      %p92 = scmp.ne.s32.totalorder %s84, %s87
      %p93 = scmp.eq.s32.totalorder %s24, 0
      %p94 = por %p92, %p93
      %p95 = scmp.ne.s32.totalorder %s84, %s87
      %p96 = scmp.eq.s32.totalorder %s29, 3
      %p97 = por %p95, %p96
      %p98 = scmp.ne.s32.totalorder %s87, %s88
      %p99 = scmp.eq.s32.totalorder %s29, 0
      %p100 = por %p98, %p99
      %p101 = scmp.ne.s32.totalorder %s87, %s88
      %p102 = scmp.eq.s32.totalorder %s30, 3
      %p103 = por %p101, %p102
      %p105 = scmp.ne.s32.totalorder %s88, %s104
      %p106 = scmp.eq.s32.totalorder %s30, 0
      %p107 = por %p105, %p106
      %s108 = smul.u32 %s32, 8
      %s109 = sadd.s32 %s108, 8
      %p110 = scmp.lt.s32.totalorder %s109, 15
      %s111 = scalar_select %p110, %s109, 15
      %s112 = smul.u32 %s39, 8
      %s113 = sadd.s32 %s112, 8
      %p114 = scmp.lt.s32.totalorder %s113, 15
      %s115 = scalar_select %p114, %s113, 15
      %s116 = ssub.s32 %s31, %s43
      %s117 = ssub.s32 %s111, %s115
      %s118 = sor.u32 %s116, %s117
      %p119 = scmp.eq.s32.totalorder %s118, 0
      %s121 = sadd.s32 %s120, 1
      %s122 = scalar_select %p119, %s120, %s121
      %p125 = pneg %p119
      %p126 = scmp.eq.s32.totalorder %s24, 3
      %p127 = por %p125, %p126
      %p128 = scmp.ne.s32.totalorder %s120, %s123
      %p129 = scmp.eq.s32.totalorder %s24, 0
      %p130 = por %p128, %p129
      %p131 = scmp.ne.s32.totalorder %s120, %s123
      %p132 = scmp.eq.s32.totalorder %s29, 3
      %p133 = por %p131, %p132
      %p134 = scmp.ne.s32.totalorder %s123, %s124
      %p135 = scmp.eq.s32.totalorder %s29, 0
      %p136 = por %p134, %p135
      %p137 = scmp.ne.s32.totalorder %s123, %s124
      %p138 = scmp.eq.s32.totalorder %s30, 3
      %p139 = por %p137, %p138
      %p141 = scmp.ne.s32.totalorder %s124, %s140
      %p142 = scmp.eq.s32.totalorder %s30, 0
      %p143 = por %p141, %p142
      %s145 = sadd.s32 %s144, 1
      %p148 = scmp.eq.s32.totalorder %s24, 3
      %p149 = scmp.ne.s32.totalorder %s144, %s146
      %p150 = scmp.eq.s32.totalorder %s24, 0
      %p151 = por %p149, %p150
      %p152 = scmp.ne.s32.totalorder %s144, %s146
      %p153 = scmp.eq.s32.totalorder %s29, 3
      %p154 = por %p152, %p153
      %p155 = scmp.ne.s32.totalorder %s146, %s147
      %p156 = scmp.eq.s32.totalorder %s29, 0
      %p157 = por %p155, %p156
      %p158 = scmp.ne.s32.totalorder %s146, %s147
      %p159 = scmp.eq.s32.totalorder %s30, 3
      %p160 = por %p158, %p159
      %p162 = scmp.ne.s32.totalorder %s147, %s161
      %p163 = scmp.eq.s32.totalorder %s30, 0
      %p164 = por %p162, %p163
      %s166 = sadd.s32 %s165, 1
      %p169 = scmp.eq.s32.totalorder %s24, 3
      %p170 = scmp.ne.s32.totalorder %s165, %s167
      %p171 = scmp.eq.s32.totalorder %s24, 0
      %p172 = por %p170, %p171
      %p173 = scmp.ne.s32.totalorder %s165, %s167
      %p174 = scmp.eq.s32.totalorder %s29, 3
      %p175 = por %p173, %p174
      %p176 = scmp.ne.s32.totalorder %s167, %s168
      %p177 = scmp.eq.s32.totalorder %s29, 0
      %p178 = por %p176, %p177
      %p179 = scmp.ne.s32.totalorder %s167, %s168
      %p180 = scmp.eq.s32.totalorder %s30, 3
      %p181 = por %p179, %p180
      %p183 = scmp.ne.s32.totalorder %s168, %s182
      %p184 = scmp.eq.s32.totalorder %s30, 0
      %p185 = por %p183, %p184
      %s187 = sadd.s32 %s186, 1
      %p190 = scmp.eq.s32.totalorder %s24, 3
      %p191 = scmp.ne.s32.totalorder %s186, %s188
      %p192 = scmp.eq.s32.totalorder %s24, 0
      %p193 = por %p191, %p192
      %p194 = scmp.ne.s32.totalorder %s186, %s188
      %p195 = scmp.eq.s32.totalorder %s29, 3
      %p196 = por %p194, %p195
      %p197 = scmp.ne.s32.totalorder %s188, %s189
      %p198 = scmp.eq.s32.totalorder %s29, 0
      %p199 = por %p197, %p198
      %p200 = scmp.ne.s32.totalorder %s188, %s189
      %p201 = scmp.eq.s32.totalorder %s30, 3
      %p202 = por %p200, %p201
      %p204 = scmp.ne.s32.totalorder %s189, %s203
      %p205 = scmp.eq.s32.totalorder %s30, 0
      %p206 = por %p204, %p205
      %s208 = sadd.s32 %s207, 1
      %p211 = scmp.eq.s32.totalorder %s24, 3
      %p212 = scmp.ne.s32.totalorder %s207, %s209
      %p213 = scmp.eq.s32.totalorder %s24, 0
      %p214 = por %p212, %p213
      %p215 = scmp.ne.s32.totalorder %s207, %s209
      %p216 = scmp.eq.s32.totalorder %s29, 3
      %p217 = por %p215, %p216
      %p218 = scmp.ne.s32.totalorder %s209, %s210
      %p219 = scmp.eq.s32.totalorder %s29, 0
      %p220 = por %p218, %p219
      %p221 = scmp.ne.s32.totalorder %s209, %s210
      %p222 = scmp.eq.s32.totalorder %s30, 3
      %p223 = por %p221, %p222
      %p225 = scmp.ne.s32.totalorder %s210, %s224
      %p226 = scmp.eq.s32.totalorder %s30, 0
      %p227 = por %p225, %p226
      %s229 = sadd.s32 %s228, 1
      %p232 = scmp.eq.s32.totalorder %s24, 3
      %p233 = scmp.ne.s32.totalorder %s228, %s230
      %p234 = scmp.eq.s32.totalorder %s24, 0
      %p235 = por %p233, %p234
      %p236 = scmp.ne.s32.totalorder %s228, %s230
      %p237 = scmp.eq.s32.totalorder %s29, 3
      %p238 = por %p236, %p237
      %p239 = scmp.ne.s32.totalorder %s230, %s231
      %p240 = scmp.eq.s32.totalorder %s29, 0
      %p241 = por %p239, %p240
      %p242 = scmp.ne.s32.totalorder %s230, %s231
      %p243 = scmp.eq.s32.totalorder %s30, 3
      %p244 = por %p242, %p243
      %p246 = scmp.ne.s32.totalorder %s231, %s245
      %p247 = scmp.eq.s32.totalorder %s30, 0
      %p248 = por %p246, %p247
      %s250 = sadd.s32 %s249, 1
      %p253 = scmp.eq.s32.totalorder %s24, 3
      %p254 = scmp.ne.s32.totalorder %s249, %s251
      %p255 = scmp.eq.s32.totalorder %s24, 0
      %p256 = por %p254, %p255
      %p257 = scmp.ne.s32.totalorder %s249, %s251
      %p258 = scmp.eq.s32.totalorder %s29, 3
      %p259 = por %p257, %p258
      %p260 = scmp.ne.s32.totalorder %s251, %s252
      %p261 = scmp.eq.s32.totalorder %s29, 0
      %p262 = por %p260, %p261
      %p263 = scmp.ne.s32.totalorder %s251, %s252
      %p264 = scmp.eq.s32.totalorder %s30, 3
      %p265 = por %p263, %p264
      %p267 = scmp.ne.s32.totalorder %s252, %s266
      %p268 = scmp.eq.s32.totalorder %s30, 0
      %p269 = por %p267, %p268
      %s270 = ssub.s32 %s31, %s43
      %s271 = ssub.s32 %s32, %s39
      %s272 = sor.u32 %s270, %s271
      %p273 = scmp.eq.s32.totalorder %s272, 0
      %s275 = sadd.s32 %s274, 1
      %s276 = scalar_select %p273, %s274, %s275
      %p279 = pneg %p273
      %p280 = scmp.eq.s32.totalorder %s24, 3
      %p281 = por %p279, %p280
      %p282 = scmp.ne.s32.totalorder %s274, %s277
      %p283 = scmp.eq.s32.totalorder %s24, 0
      %p284 = por %p282, %p283
      %p285 = scmp.ne.s32.totalorder %s274, %s277
      %p286 = scmp.eq.s32.totalorder %s29, 3
      %p287 = por %p285, %p286
      %p288 = scmp.ne.s32.totalorder %s277, %s278
      %p289 = scmp.eq.s32.totalorder %s29, 0
      %p290 = por %p288, %p289
      %p291 = scmp.ne.s32.totalorder %s277, %s278
      %p292 = scmp.eq.s32.totalorder %s30, 3
      %p293 = por %p291, %p292
      %p295 = scmp.ne.s32.totalorder %s278, %s294
      %p296 = scmp.eq.s32.totalorder %s30, 0
      %p297 = por %p295, %p296
      %p298 = scmp.le.s32.totalorder 1, %s24
      %p299 = scmp.lt.s32.totalorder %s24, 5
      %p300 = pnand %p298, %p299
      %p301 = pneg %p300
      // Predicated region
      $region9: #{tpu_custom_call.1} parent=5 // pred_check
        _
      $region10: #{tpu_custom_call.1} parent=5 // pred_check_branch
        %303 = sbr.rel (%p300) target = $region12
      $region11: #{tpu_custom_call.1} parent=5 // pred_region
        %s304 = ssub.s32 %s24, 1
        // Predicated region
        $region13: #{tpu_custom_call.1} parent=11 // pred_check
          %p305 = pneg %p157
        $region14: #{tpu_custom_call.1} parent=11 // pred_check_branch
          %307 = sbr.rel (%p305) target = $region16
        $region15: #{tpu_custom_call.1} parent=11 // pred_region
          _
        $region16: #{tpu_custom_call.1} parent=11 // pred_fallthru
          _
        // Predicated region
        $region17: #{tpu_custom_call.1} parent=11 // pred_check
          %p308 = pneg %p178
        $region18: #{tpu_custom_call.1} parent=11 // pred_check_branch
          %310 = sbr.rel (%p308) target = $region20
        $region19: #{tpu_custom_call.1} parent=11 // pred_region
          _
        $region20: #{tpu_custom_call.1} parent=11 // pred_fallthru
          _
        // Predicated region
        $region21: #{tpu_custom_call.1} parent=11 // pred_check
          %p311 = pneg %p199
        $region22: #{tpu_custom_call.1} parent=11 // pred_check_branch
          %313 = sbr.rel (%p311) target = $region24
        $region23: #{tpu_custom_call.1} parent=11 // pred_region
          _
        $region24: #{tpu_custom_call.1} parent=11 // pred_fallthru
          _
        // Predicated region
        $region25: #{tpu_custom_call.1} parent=11 // pred_check
          %p314 = pneg %p220
        $region26: #{tpu_custom_call.1} parent=11 // pred_check_branch
          %316 = sbr.rel (%p314) target = $region28
        $region27: #{tpu_custom_call.1} parent=11 // pred_region
          _
        $region28: #{tpu_custom_call.1} parent=11 // pred_fallthru
          _
        // Predicated region
        $region29: #{tpu_custom_call.1} parent=11 // pred_check
          %p317 = pneg %p241
        $region30: #{tpu_custom_call.1} parent=11 // pred_check_branch
          %319 = sbr.rel (%p317) target = $region32
        $region31: #{tpu_custom_call.1} parent=11 // pred_region
          _
        $region32: #{tpu_custom_call.1} parent=11 // pred_fallthru
          _
        // Predicated region
        $region33: #{tpu_custom_call.1} parent=11 // pred_check
          %p320 = pneg %p262
        $region34: #{tpu_custom_call.1} parent=11 // pred_check_branch
          %322 = sbr.rel (%p320) target = $region36
        $region35: #{tpu_custom_call.1} parent=11 // pred_region
          _
        $region36: #{tpu_custom_call.1} parent=11 // pred_fallthru
          _
      $region12: #{tpu_custom_call.1} parent=5 // pred_fallthru
        _
      %p323 = scmp.lt.s32.totalorder %s24, 4
      // Predicated region
      $region37: #{tpu_custom_call.1} parent=5 // pred_check
        %p324 = pneg %p323
      $region38: #{tpu_custom_call.1} parent=5 // pred_check_branch
        %326 = sbr.rel (%p324) target = $region40
      $region39: #{tpu_custom_call.1} parent=5 // pred_region
        // Predicated region
        $region41: #{tpu_custom_call.1} parent=39 // pred_check
          %p327 = pneg %p58
        $region42: #{tpu_custom_call.1} parent=39 // pred_check_branch
          %329 = sbr.rel (%p327) target = $region44
        $region43: #{tpu_custom_call.1} parent=39 // pred_region
          %s330 = sand.u32 %s48, 1
          %s331 = scalar_lea.sflag [#allocation3], %s330
          %s332 = sand.u32 %s48, 1
          %s333 = smul.addr %s332, 64
          %s334 = scalar_lea.vmem [#allocation2], %s333
          %s335 = smul.u32 8, %s32
          %s337 = ssub.s32 1024, 1024
          %338 = vsyncadd %s331, %s337
          %s339 = smul.addr %s335, 2
          %s340 = smul.addr %s31, 32
          %s341 = sadd.s32 %s339, %s340
          %s342 = smul.addr %s341, 64
          %s343 = scalar_lea.hbm %s0, %s342
          %s344 = sshll.u32 %s334, 4
          %s345 = int_to_ptr.vmem [resolvable:$true] %s344
          %350 = dma.hbm_to_vmem [thread:$0]  %s343, 1024, %s345, %s331, 64, 64, 4
        $region44: #{tpu_custom_call.1} parent=39 // pred_fallthru
          _
        // Predicated region
        $region45: #{tpu_custom_call.1} parent=39 // pred_check
          %p351 = pneg %p94
        $region46: #{tpu_custom_call.1} parent=39 // pred_check_branch
          %353 = sbr.rel (%p351) target = $region48
        $region47: #{tpu_custom_call.1} parent=39 // pred_region
          %s354 = sand.u32 %s24, 1
          %s355 = scalar_lea.sflag [#allocation6], %s354
          %s356 = sand.u32 %s84, 1
          %s357 = smul.addr %s356, 8
          %s358 = scalar_lea.vmem [#allocation5], %s357
          %s359 = smul.u32 %s32, 8
          %s360 = ssub.s32 %s359, 1
          %p361 = scmp.gt.s32.totalorder %s360, 0
          %s362 = scalar_select %p361, %s360, 0
          %s364 = ssub.s32 128, 128
          %365 = vsyncadd %s355, %s364
          %s366 = smul.addr %s362, 2
          %s367 = smul.addr %s31, 32
          %s368 = sadd.s32 %s366, %s367
          %s369 = smul.addr %s368, 64
          %s370 = scalar_lea.hbm %s1, %s369
          %s371 = sshll.u32 %s358, 4
          %s372 = int_to_ptr.vmem [resolvable:$true] %s371
          %377 = dma.hbm_to_vmem [thread:$0]  %s370, 128, %s372, %s355, 64, 64, 4
        $region48: #{tpu_custom_call.1} parent=39 // pred_fallthru
          _
        // Predicated region
        $region49: #{tpu_custom_call.1} parent=39 // pred_check
          %p378 = pneg %p130
        $region50: #{tpu_custom_call.1} parent=39 // pred_check_branch
          %380 = sbr.rel (%p378) target = $region52
        $region51: #{tpu_custom_call.1} parent=39 // pred_region
          %s381 = sand.u32 %s24, 1
          %s382 = scalar_lea.sflag [#allocation6], %s381
          %s383 = sand.u32 %s120, 1
          %s384 = smul.addr %s383, 8
          %s385 = scalar_lea.vmem [#allocation7], %s384
          %s386 = smul.u32 %s32, 8
          %s387 = sadd.s32 %s386, 8
          %p388 = scmp.lt.s32.totalorder %s387, 15
          %s389 = scalar_select %p388, %s387, 15
          %s391 = ssub.s32 128, 128
          %392 = vsyncadd %s382, %s391
          %s393 = smul.addr %s389, 2
          %s394 = smul.addr %s31, 32
          %s395 = sadd.s32 %s393, %s394
          %s396 = smul.addr %s395, 64
          %s397 = scalar_lea.hbm %s2, %s396
          %s398 = sshll.u32 %s385, 4
          %s399 = int_to_ptr.vmem [resolvable:$true] %s398
          %404 = dma.hbm_to_vmem [thread:$0]  %s397, 128, %s399, %s382, 64, 64, 4
        $region52: #{tpu_custom_call.1} parent=39 // pred_fallthru
          _
      $region40: #{tpu_custom_call.1} parent=5 // pred_fallthru
        _
      %p405 = scmp.le.s32.totalorder 1, %s24
      %p406 = scmp.lt.s32.totalorder %s24, 5
      %p407 = pnand %p405, %p406
      %p408 = pneg %p407
      // Predicated region
      $region53: #{tpu_custom_call.1} parent=5 // pred_check
        _
      $region54: #{tpu_custom_call.1} parent=5 // pred_check_branch
        %410 = sbr.rel (%p407) target = $region56
      $region55: #{tpu_custom_call.1} parent=5 // pred_region
        %s411 = ssub.s32 %s24, 1
        %s412 = sand.u32 %s51, 1
        %s413 = scalar_lea.sflag [#allocation3], %s412
        %s414 = sand.u32 %s51, 1
        %s415 = smul.addr %s414, 64
        %s416 = scalar_lea.vmem [#allocation2], %s415
        // Predicated region
        $region57: #{tpu_custom_call.1} parent=55 // pred_check
          %p417 = pneg %p64
        $region58: #{tpu_custom_call.1} parent=55 // pred_check_branch
          %419 = sbr.rel (%p417) target = $region60
        $region59: #{tpu_custom_call.1} parent=55 // pred_region
          %420 = dma.done %s413, 1024
        $region60: #{tpu_custom_call.1} parent=55 // pred_fallthru
          _
        %s421 = sand.u32 %s29, 1
        %s422 = scalar_lea.sflag [#allocation6], %s421
        %s423 = sand.u32 %s87, 1
        %s424 = smul.addr %s423, 8
        %s425 = scalar_lea.vmem [#allocation5], %s424
        // Predicated region
        $region61: #{tpu_custom_call.1} parent=55 // pred_check
          %p426 = pneg %p100
        $region62: #{tpu_custom_call.1} parent=55 // pred_check_branch
          %428 = sbr.rel (%p426) target = $region64
        $region63: #{tpu_custom_call.1} parent=55 // pred_region
          %429 = dma.done %s422, 128
        $region64: #{tpu_custom_call.1} parent=55 // pred_fallthru
          _
        %s430 = sand.u32 %s29, 1
        %s431 = scalar_lea.sflag [#allocation6], %s430
        %s432 = sand.u32 %s123, 1
        %s433 = smul.addr %s432, 8
        %s434 = scalar_lea.vmem [#allocation7], %s433
        // Predicated region
        $region65: #{tpu_custom_call.1} parent=55 // pred_check
          %p435 = pneg %p136
        $region66: #{tpu_custom_call.1} parent=55 // pred_check_branch
          %437 = sbr.rel (%p435) target = $region68
        $region67: #{tpu_custom_call.1} parent=55 // pred_region
          %438 = dma.done %s431, 128
        $region68: #{tpu_custom_call.1} parent=55 // pred_fallthru
          _
        %s439 = sand.u32 %s51, 1
        %s440 = scalar_lea.sflag [#allocation3], %s439
        %s441 = sand.u32 %s51, 1
        %s442 = smul.addr %s441, 64
        %s443 = scalar_lea.vmem [#allocation2], %s442
        %p444 = pneg %p64
        %p445 = pneg %p61
        %s446 = sand.u32 %s29, 1
        %s447 = scalar_lea.sflag [#allocation6], %s446
        %s448 = sand.u32 %s87, 1
        %s449 = smul.addr %s448, 8
        %s450 = scalar_lea.vmem [#allocation5], %s449
        %p451 = pneg %p100
        %p452 = pneg %p97
        %s453 = sand.u32 %s29, 1
        %s454 = scalar_lea.sflag [#allocation6], %s453
        %s455 = sand.u32 %s123, 1
        %s456 = smul.addr %s455, 8
        %s457 = scalar_lea.vmem [#allocation7], %s456
        %p458 = pneg %p136
        %p459 = pneg %p133
        %p460 = pneg %p157
        %p461 = pneg %p154
        %p462 = pneg %p178
        %p463 = pneg %p175
        %p464 = pneg %p199
        %p465 = pneg %p196
        %p466 = pneg %p220
        %p467 = pneg %p217
        %p468 = pneg %p241
        %p469 = pneg %p238
        %p470 = pneg %p262
        %p471 = pneg %p259
        %p472 = pneg %p290
        %p473 = pneg %p287
        %s474 = sand.u32 %s277, 1
        %s475 = scalar_lea.sflag [#allocation4], %s474
        %s476 = sand.u32 %s277, 1
        %s477 = smul.addr %s476, 64
        %s478 = scalar_lea.vmem [#allocation8], %s477
        %s479 = smul.u32 8, %s34
        %s480 = smul.u32 %s34, 8
        %s481 = ssub.s32 %s480, 1
        %p482 = scmp.gt.s32.totalorder %s481, 0
        %s483 = scalar_select %p482, %s481, 0
        %s484 = smul.u32 %s34, 8
        %s485 = sadd.s32 %s484, 8
        %p486 = scmp.lt.s32.totalorder %s485, 15
        %s487 = scalar_select %p486, %s485, 15
        %s488 = smul.u32 8, %s34
        %p490 = scmp.eq.s32.totalorder %s34, 0
        %p491 = scmp.eq.s32.totalorder %s34, 1
        %v492 = vld [vmem:[%s416] sm:$0xf]
        %v493 = vld [vmem:[%s416 + $0x4] sm:$0xf]
        %v494 = vld [vmem:[%s416 + $0x8] sm:$0xf]
        %v495 = vld [vmem:[%s416 + $0xc] sm:$0xf]
        %v496 = vld [vmem:[%s416 + $0x10] sm:$0xf]
        %v497 = vld [vmem:[%s416 + $0x14] sm:$0xf]
        %v498 = vld [vmem:[%s416 + $0x18] sm:$0xf]
        %v499 = vld [vmem:[%s416 + $0x1c] sm:$0xf]
        %v500 = vld [vmem:[%s416 + $0x20] sm:$0xf]
        %v501 = vld [vmem:[%s416 + $0x24] sm:$0xf]
        %v502 = vld [vmem:[%s416 + $0x28] sm:$0xf]
        %v503 = vld [vmem:[%s416 + $0x2c] sm:$0xf]
        %v504 = vld [vmem:[%s416 + $0x30] sm:$0xf]
        %v505 = vld [vmem:[%s416 + $0x34] sm:$0xf]
        %v506 = vld [vmem:[%s416 + $0x38] sm:$0xf]
        %v507 = vld [vmem:[%s416 + $0x3c] sm:$0xf]
        %v508 = vld [vmem:[%s425] sm:$0xf]
        %v509 = vld [vmem:[%s425 + $0x4] sm:$0xf]
        %v510 = vld [vmem:[%s434] sm:$0xf]
        %v511 = vld [vmem:[%s434 + $0x4] sm:$0xf]
        %v514 = vunpack.c.l.b16 %v508
        %v515 = vunpack.c.l.b16 %v509
        %v516 = vpack.c.b16 %v515, %v514
        %v533 = vunpack.c.l.b16 %v492
        %v534 = vunpack.c.l.b16 %v493
        %v535 = vunpack.c.l.b16 %v494
        %v536 = vunpack.c.l.b16 %v495
        %v537 = vunpack.c.l.b16 %v496
        %v538 = vunpack.c.l.b16 %v497
        %v539 = vunpack.c.l.b16 %v498
        %v540 = vunpack.c.l.b16 %v499
        %v541 = vunpack.c.l.b16 %v500
        %v542 = vunpack.c.l.b16 %v501
        %v543 = vunpack.c.l.b16 %v502
        %v544 = vunpack.c.l.b16 %v503
        %v545 = vunpack.c.l.b16 %v504
        %v546 = vunpack.c.l.b16 %v505
        %v547 = vunpack.c.l.b16 %v506
        %v548 = vunpack.c.l.b16 %v507
        %v549 = vpack.c.b16 %v534, %v533
        %v550 = vpack.c.b16 %v536, %v535
        %v551 = vpack.c.b16 %v538, %v537
        %v552 = vpack.c.b16 %v540, %v539
        %v553 = vpack.c.b16 %v542, %v541
        %v554 = vpack.c.b16 %v544, %v543
        %v555 = vpack.c.b16 %v546, %v545
        %v556 = vpack.c.b16 %v548, %v547
        %v559 = vunpack.c.l.b16 %v510
        %v560 = vunpack.c.l.b16 %v511
        %v561 = vpack.c.b16 %v560, %v559
        %v562 = vld [vmem:[%s3] sm:$0xf]
        %v563 = vld [vmem:[%s3 + $0x4] sm:$0xf]
        %v564 = vld [vmem:[%s4] sm:$0x1]
        %v566 = vlaneseq
        %v567 = vshrl.u32 %v566, 7
        %v568 = vsub.s32 0, %v567
        %v569 = vrot.slane %v564, %v568
        %v573 = vunpack.c.l.b16 %v562
        %v574 = vunpack.c.l.b16 %v563
        %v575 = vpack.c.b16 %v574, %v573
        %vm577 = vcmask 130048
        %v579 = vsel %vm577, %v516, 0
        %v582 = vsel %vm577, %v549, 0
        %v585 = vsel %vm577, %v550, 0
        %v588 = vsel %vm577, %v551, 0
        %v591 = vsel %vm577, %v552, 0
        %v594 = vsel %vm577, %v553, 0
        %v597 = vsel %vm577, %v554, 0
        %v600 = vsel %vm577, %v555, 0
        %v603 = vsel %vm577, %v556, 0
        %v606 = vsel %vm577, %v561, 0
        %608 = vmatprep.subr.bf16.mxu0 0
        %609 = vmatpush1.bf16.msra.mxu0 %v575
        %610 = vmatprep.subr.bf16.mxu0 0
        %611 = vmatpush1.bf16.msra.mxu0 0
        %612 = vmatprep.subr.bf16.mxu0 0
        %613 = vmatpush1.bf16.msra.mxu0 0
        %614 = vmatprep.subr.bf16.mxu0 0
        %615 = vmatpush1.bf16.msra.mxu0 0
        %616 = vmatprep.subr.bf16.mxu0 0
        %617 = vmatpush1.bf16.msra.mxu0 0
        %618 = vmatprep.subr.bf16.mxu0 0
        %619 = vmatpush1.bf16.msra.mxu0 0
        %620 = vmatprep.subr.bf16.mxu0 0
        %621 = vmatpush1.bf16.msra.mxu0 0
        %622 = vmatprep.subr.bf16.mxu0 0
        %623 = vmatpush1.bf16.msra.mxu0 0
        %624 = vmatprep.subr.bf16.mxu0 0
        %625 = vmatpush1.bf16.msra.mxu0 0
        %626 = vmatprep.subr.bf16.mxu0 0
        %627 = vmatpush1.bf16.msra.mxu0 0
        %628 = vmatprep.subr.bf16.mxu0 0
        %629 = vmatpush1.bf16.msra.mxu0 0
        %630 = vmatprep.subr.bf16.mxu0 0
        %631 = vmatpush1.bf16.msra.mxu0 0
        %632 = vmatprep.subr.bf16.mxu0 0
        %633 = vmatpush1.bf16.msra.mxu0 0
        %634 = vmatprep.subr.bf16.mxu0 0
        %635 = vmatpush1.bf16.msra.mxu0 0
        %636 = vmatprep.subr.bf16.mxu0 0
        %637 = vmatpush1.bf16.msra.mxu0 0
        %638 = vmatprep.subr.bf16.mxu0 0
        %639 = vmatpush1.bf16.msra.mxu0 0
        %640 = vmatprep.mubr.bf16.mxu0 0
        %641 = vmatmul.mubr.bf16.gmra.mrb[0].mxu0 %v579
        %v642 = vpop.f32.mrb[0].mxu0
        %v643 = vadd.f32 %v569, %v642
        %v644 = vpop.f32.mrb[0].mxu0
        %v645 = vpop.f32.mrb[0].mxu0
        %v646 = vadd.f32 %v569, %v645
        %v647 = vpop.f32.mrb[0].mxu0
        %648 = vmatprep.mubr.bf16.mxu0 0
        %649 = vmatmul.mubr.bf16.gmra.mrb[0].mxu0 %v582
        %v650 = vpop.f32.mrb[0].mxu0
        %v651 = vadd.f32 %v569, %v650
        %v652 = vpop.f32.mrb[0].mxu0
        %v653 = vpop.f32.mrb[0].mxu0
        %v654 = vadd.f32 %v569, %v653
        %v655 = vpop.f32.mrb[0].mxu0
        %656 = vmatprep.mubr.bf16.mxu0 0
        %657 = vmatmul.mubr.bf16.gmra.mrb[0].mxu0 %v585
        %v658 = vpop.f32.mrb[0].mxu0
        %v659 = vadd.f32 %v569, %v658
        %v660 = vpop.f32.mrb[0].mxu0
        %v661 = vpop.f32.mrb[0].mxu0
        %v662 = vadd.f32 %v569, %v661
        %v663 = vpop.f32.mrb[0].mxu0
        %664 = vmatprep.mubr.bf16.mxu0 0
        %665 = vmatmul.mubr.bf16.gmra.mrb[0].mxu0 %v588
        %v666 = vpop.f32.mrb[0].mxu0
        %v667 = vadd.f32 %v569, %v666
        %v668 = vpop.f32.mrb[0].mxu0
        %v669 = vpop.f32.mrb[0].mxu0
        %v670 = vadd.f32 %v569, %v669
        %v671 = vpop.f32.mrb[0].mxu0
        %672 = vmatprep.mubr.bf16.mxu0 0
        %673 = vmatmul.mubr.bf16.gmra.mrb[0].mxu0 %v591
        %v674 = vpop.f32.mrb[0].mxu0
        %v675 = vadd.f32 %v569, %v674
        %v676 = vpop.f32.mrb[0].mxu0
        %v677 = vpop.f32.mrb[0].mxu0
        %v678 = vadd.f32 %v569, %v677
        %v679 = vpop.f32.mrb[0].mxu0
        %680 = vmatprep.mubr.bf16.mxu0 0
        %681 = vmatmul.mubr.bf16.gmra.mrb[0].mxu0 %v594
        %v682 = vpop.f32.mrb[0].mxu0
        %v683 = vadd.f32 %v569, %v682
        %v684 = vpop.f32.mrb[0].mxu0
        %v685 = vpop.f32.mrb[0].mxu0
        %v686 = vadd.f32 %v569, %v685
        %v687 = vpop.f32.mrb[0].mxu0
        %688 = vmatprep.mubr.bf16.mxu0 0
        %689 = vmatmul.mubr.bf16.gmra.mrb[0].mxu0 %v597
        %v690 = vpop.f32.mrb[0].mxu0
        %v691 = vadd.f32 %v569, %v690
        %v692 = vpop.f32.mrb[0].mxu0
        %v693 = vpop.f32.mrb[0].mxu0
        %v694 = vadd.f32 %v569, %v693
        %v695 = vpop.f32.mrb[0].mxu0
        %696 = vmatprep.mubr.bf16.mxu0 0
        %697 = vmatmul.mubr.bf16.gmra.mrb[0].mxu0 %v600
        %v698 = vpop.f32.mrb[0].mxu0
        %v699 = vadd.f32 %v569, %v698
        %v700 = vpop.f32.mrb[0].mxu0
        %v701 = vpop.f32.mrb[0].mxu0
        %v702 = vadd.f32 %v569, %v701
        %v703 = vpop.f32.mrb[0].mxu0
        %704 = vmatprep.mubr.bf16.mxu0 0
        %705 = vmatmul.mubr.bf16.gmra.mrb[0].mxu0 %v603
        %v706 = vpop.f32.mrb[0].mxu0
        %v707 = vadd.f32 %v569, %v706
        %v708 = vpop.f32.mrb[0].mxu0
        %v709 = vpop.f32.mrb[0].mxu0
        %v710 = vadd.f32 %v569, %v709
        %v711 = vpop.f32.mrb[0].mxu0
        %712 = vmatprep.mubr.bf16.mxu0 0
        %713 = vmatmul.mubr.bf16.gmra.mrb[0].mxu0 %v606
        %v714 = vpop.f32.mrb[0].mxu0
        %v715 = vadd.f32 %v569, %v714
        %v716 = vpop.f32.mrb[0].mxu0
        %v717 = vpop.f32.mrb[0].mxu0
        %v718 = vadd.f32 %v569, %v717
        %v719 = vpop.f32.mrb[0].mxu0
        %720 = vdwg.mxu0
        %v721 = vmax.f32 %v643, 0.0
        %v722 = vmax.f32 %v646, 0.0
        %v723 = vmax.f32 %v651, 0.0
        %v724 = vmax.f32 %v654, 0.0
        %v725 = vmax.f32 %v659, 0.0
        %v726 = vmax.f32 %v662, 0.0
        %v727 = vmax.f32 %v667, 0.0
        %v728 = vmax.f32 %v670, 0.0
        %v729 = vmax.f32 %v675, 0.0
        %v730 = vmax.f32 %v678, 0.0
        %v731 = vmax.f32 %v683, 0.0
        %v732 = vmax.f32 %v686, 0.0
        %v733 = vmax.f32 %v691, 0.0
        %v734 = vmax.f32 %v694, 0.0
        %v735 = vmax.f32 %v699, 0.0
        %v736 = vmax.f32 %v702, 0.0
        %v737 = vmax.f32 %v707, 0.0
        %v738 = vmax.f32 %v710, 0.0
        %v739 = vmax.f32 %v715, 0.0
        %v740 = vmax.f32 %v718, 0.0
        %v741 = vlaneseq
        %v742 = vshrl.u32 %v741, 7
        %v743 = vadd.s32 %v742, 8
        %v744 = vadd.s32 %v742, 16
        %v745 = vadd.s32 %v742, 24
        %v746 = vadd.s32 %v742, 32
        %v747 = vadd.s32 %v742, 40
        %v748 = vadd.s32 %v742, 48
        %v749 = vadd.s32 %v742, 56
        %v750 = vadd.s32 %v742, 64
        %v751 = vadd.s32 %v742, 72
        %v752 = vadd.s32 %v742, 80
        %v753 = vadd.s32 %v742, 88
        %v754 = vadd.s32 %v742, 96
        %v755 = vadd.s32 %v742, 104
        %v756 = vadd.s32 %v742, 112
        %v757 = vadd.s32 %v742, 120
        %v758 = vadd.s32 %v742, 128
        %v759 = vadd.s32 %v742, 136
        %v760 = vadd.s32 %v742, 144
        %v761 = vadd.s32 %v742, 152
        %vm762 = vcmp.lt.s32.totalorder %v742, 16
        %vm763 = vcmp.lt.s32.totalorder %v743, 16
        %vm764 = vcmp.lt.s32.totalorder %v744, 16
        %vm765 = vcmp.lt.s32.totalorder %v745, 16
        %vm766 = vcmp.lt.s32.totalorder %v746, 16
        %vm767 = vcmp.lt.s32.totalorder %v747, 16
        %vm768 = vcmp.lt.s32.totalorder %v748, 16
        %vm769 = vcmp.lt.s32.totalorder %v749, 16
        %vm770 = vcmp.lt.s32.totalorder %v750, 16
        %vm771 = vcmp.lt.s32.totalorder %v751, 16
        %vm772 = vcmp.lt.s32.totalorder %v752, 16
        %vm773 = vcmp.lt.s32.totalorder %v753, 16
        %vm774 = vcmp.lt.s32.totalorder %v754, 16
        %vm775 = vcmp.lt.s32.totalorder %v755, 16
        %vm776 = vcmp.lt.s32.totalorder %v756, 16
        %vm777 = vcmp.lt.s32.totalorder %v757, 16
        %vm778 = vcmp.lt.s32.totalorder %v758, 16
        %vm779 = vcmp.lt.s32.totalorder %v759, 16
        %vm780 = vcmp.lt.s32.totalorder %v760, 16
        %vm781 = vcmp.lt.s32.totalorder %v761, 16
        %s782 = scalar_select %p490, 1, 0
        %v783 = vstv %s782
        %vm784 = vcmp.eq.s32.totalorder %v783, 1
        %vm785 = vmand %vm784, %vm762
        %vm786 = vmand %vm784, %vm763
        %vm787 = vmand %vm784, %vm764
        %vm788 = vmand %vm784, %vm765
        %vm789 = vmand %vm784, %vm766
        %vm790 = vmand %vm784, %vm767
        %vm791 = vmand %vm784, %vm768
        %vm792 = vmand %vm784, %vm769
        %vm793 = vmand %vm784, %vm770
        %vm794 = vmand %vm784, %vm771
        %vm795 = vmand %vm784, %vm772
        %vm796 = vmand %vm784, %vm773
        %vm797 = vmand %vm784, %vm774
        %vm798 = vmand %vm784, %vm775
        %vm799 = vmand %vm784, %vm776
        %vm800 = vmand %vm784, %vm777
        %vm801 = vmand %vm784, %vm778
        %vm802 = vmand %vm784, %vm779
        %vm803 = vmand %vm784, %vm780
        %vm804 = vmand %vm784, %vm781
        %vm805 = vcmp.ge.s32.totalorder %v742, 144
        %vm806 = vcmp.ge.s32.totalorder %v743, 144
        %vm807 = vcmp.ge.s32.totalorder %v744, 144
        %vm808 = vcmp.ge.s32.totalorder %v745, 144
        %vm809 = vcmp.ge.s32.totalorder %v746, 144
        %vm810 = vcmp.ge.s32.totalorder %v747, 144
        %vm811 = vcmp.ge.s32.totalorder %v748, 144
        %vm812 = vcmp.ge.s32.totalorder %v749, 144
        %vm813 = vcmp.ge.s32.totalorder %v750, 144
        %vm814 = vcmp.ge.s32.totalorder %v751, 144
        %vm815 = vcmp.ge.s32.totalorder %v752, 144
        %vm816 = vcmp.ge.s32.totalorder %v753, 144
        %vm817 = vcmp.ge.s32.totalorder %v754, 144
        %vm818 = vcmp.ge.s32.totalorder %v755, 144
        %vm819 = vcmp.ge.s32.totalorder %v756, 144
        %vm820 = vcmp.ge.s32.totalorder %v757, 144
        %vm821 = vcmp.ge.s32.totalorder %v758, 144
        %vm822 = vcmp.ge.s32.totalorder %v759, 144
        %vm823 = vcmp.ge.s32.totalorder %v760, 144
        %vm824 = vcmp.ge.s32.totalorder %v761, 144
        %s825 = scalar_select %p491, 1, 0
        %v826 = vstv %s825
        %vm827 = vcmp.eq.s32.totalorder %v826, 1
        %vm828 = vmand %vm827, %vm805
        %vm829 = vmand %vm827, %vm806
        %vm830 = vmand %vm827, %vm807
        %vm831 = vmand %vm827, %vm808
        %vm832 = vmand %vm827, %vm809
        %vm833 = vmand %vm827, %vm810
        %vm834 = vmand %vm827, %vm811
        %vm835 = vmand %vm827, %vm812
        %vm836 = vmand %vm827, %vm813
        %vm837 = vmand %vm827, %vm814
        %vm838 = vmand %vm827, %vm815
        %vm839 = vmand %vm827, %vm816
        %vm840 = vmand %vm827, %vm817
        %vm841 = vmand %vm827, %vm818
        %vm842 = vmand %vm827, %vm819
        %vm843 = vmand %vm827, %vm820
        %vm844 = vmand %vm827, %vm821
        %vm845 = vmand %vm827, %vm822
        %vm846 = vmand %vm827, %vm823
        %vm847 = vmand %vm827, %vm824
        %vm848 = vmor %vm785, %vm828
        %vm849 = vmor %vm786, %vm829
        %vm850 = vmor %vm787, %vm830
        %vm851 = vmor %vm788, %vm831
        %vm852 = vmor %vm789, %vm832
        %vm853 = vmor %vm790, %vm833
        %vm854 = vmor %vm791, %vm834
        %vm855 = vmor %vm792, %vm835
        %vm856 = vmor %vm793, %vm836
        %vm857 = vmor %vm794, %vm837
        %vm858 = vmor %vm795, %vm838
        %vm859 = vmor %vm796, %vm839
        %vm860 = vmor %vm797, %vm840
        %vm861 = vmor %vm798, %vm841
        %vm862 = vmor %vm799, %vm842
        %vm863 = vmor %vm800, %vm843
        %vm864 = vmor %vm801, %vm844
        %vm865 = vmor %vm802, %vm845
        %vm866 = vmor %vm803, %vm846
        %vm867 = vmor %vm804, %vm847
        %v868 = vsel %vm848, 1, 0
        %v869 = vsel %vm849, 1, 0
        %v870 = vsel %vm850, 1, 0
        %v871 = vsel %vm851, 1, 0
        %v872 = vsel %vm852, 1, 0
        %v873 = vsel %vm853, 1, 0
        %v874 = vsel %vm854, 1, 0
        %v875 = vsel %vm855, 1, 0
        %v876 = vsel %vm856, 1, 0
        %v877 = vsel %vm857, 1, 0
        %v878 = vsel %vm858, 1, 0
        %v879 = vsel %vm859, 1, 0
        %v880 = vsel %vm860, 1, 0
        %v881 = vsel %vm861, 1, 0
        %v882 = vsel %vm862, 1, 0
        %v883 = vsel %vm863, 1, 0
        %v884 = vsel %vm864, 1, 0
        %v885 = vsel %vm865, 1, 0
        %v886 = vsel %vm866, 1, 0
        %v887 = vsel %vm867, 1, 0
        %vm888 = vcmp.eq.s32.totalorder %v868, 1
        %vm889 = vcmp.eq.s32.totalorder %v869, 1
        %vm890 = vcmp.eq.s32.totalorder %v870, 1
        %vm891 = vcmp.eq.s32.totalorder %v871, 1
        %vm892 = vcmp.eq.s32.totalorder %v872, 1
        %vm893 = vcmp.eq.s32.totalorder %v873, 1
        %vm894 = vcmp.eq.s32.totalorder %v874, 1
        %vm895 = vcmp.eq.s32.totalorder %v875, 1
        %vm896 = vcmp.eq.s32.totalorder %v876, 1
        %vm897 = vcmp.eq.s32.totalorder %v877, 1
        %vm898 = vcmp.eq.s32.totalorder %v878, 1
        %vm899 = vcmp.eq.s32.totalorder %v879, 1
        %vm900 = vcmp.eq.s32.totalorder %v880, 1
        %vm901 = vcmp.eq.s32.totalorder %v881, 1
        %vm902 = vcmp.eq.s32.totalorder %v882, 1
        %vm903 = vcmp.eq.s32.totalorder %v883, 1
        %vm904 = vcmp.eq.s32.totalorder %v884, 1
        %vm905 = vcmp.eq.s32.totalorder %v885, 1
        %vm906 = vcmp.eq.s32.totalorder %v886, 1
        %vm907 = vcmp.eq.s32.totalorder %v887, 1
        %v908 = vsel %vm888, 0.0, %v721
        %v909 = vsel %vm889, 0.0, %v722
        %v910 = vsel %vm890, 0.0, %v723
        %v911 = vsel %vm891, 0.0, %v724
        %v912 = vsel %vm892, 0.0, %v725
        %v913 = vsel %vm893, 0.0, %v726
        %v914 = vsel %vm894, 0.0, %v727
        %v915 = vsel %vm895, 0.0, %v728
        %v916 = vsel %vm896, 0.0, %v729
        %v917 = vsel %vm897, 0.0, %v730
        %v918 = vsel %vm898, 0.0, %v731
        %v919 = vsel %vm899, 0.0, %v732
        %v920 = vsel %vm900, 0.0, %v733
        %v921 = vsel %vm901, 0.0, %v734
        %v922 = vsel %vm902, 0.0, %v735
        %v923 = vsel %vm903, 0.0, %v736
        %v924 = vsel %vm904, 0.0, %v737
        %v925 = vsel %vm905, 0.0, %v738
        %v926 = vsel %vm906, 0.0, %v739
        %v927 = vsel %vm907, 0.0, %v740
        %vm928 = vcmp.lt.s32.totalorder %v742, 0
        %v929 = vsub.s32 0, %v742
        %v930 = vsel %vm928, %v929, %v742
        %v931 = vshrl.u32 %v930, 4
        %v932 = vand.u32 %v930, 15
        %v933 = vsub.s32 0, %v932
        %v934 = vsel %vm928, %v933, %v932
        %vm935 = vcmp.lt.s32.totalorder %v743, 0
        %v936 = vsub.s32 0, %v743
        %v937 = vsel %vm935, %v936, %v743
        %v938 = vshrl.u32 %v937, 4
        %v939 = vand.u32 %v937, 15
        %v940 = vsub.s32 0, %v939
        %v941 = vsel %vm935, %v940, %v939
        %vm942 = vcmp.lt.s32.totalorder %v744, 0
        %v943 = vsub.s32 0, %v744
        %v944 = vsel %vm942, %v943, %v744
        %v945 = vshrl.u32 %v944, 4
        %v946 = vand.u32 %v944, 15
        %v947 = vsub.s32 0, %v946
        %v948 = vsel %vm942, %v947, %v946
        %vm949 = vcmp.lt.s32.totalorder %v745, 0
        %v950 = vsub.s32 0, %v745
        %v951 = vsel %vm949, %v950, %v745
        %v952 = vshrl.u32 %v951, 4
        %v953 = vand.u32 %v951, 15
        %v954 = vsub.s32 0, %v953
        %v955 = vsel %vm949, %v954, %v953
        %vm956 = vcmp.lt.s32.totalorder %v746, 0
        %v957 = vsub.s32 0, %v746
        %v958 = vsel %vm956, %v957, %v746
        %v959 = vshrl.u32 %v958, 4
        %v960 = vand.u32 %v958, 15
        %v961 = vsub.s32 0, %v960
        %v962 = vsel %vm956, %v961, %v960
        %vm963 = vcmp.lt.s32.totalorder %v747, 0
        %v964 = vsub.s32 0, %v747
        %v965 = vsel %vm963, %v964, %v747
        %v966 = vshrl.u32 %v965, 4
        %v967 = vand.u32 %v965, 15
        %v968 = vsub.s32 0, %v967
        %v969 = vsel %vm963, %v968, %v967
        %vm970 = vcmp.lt.s32.totalorder %v748, 0
        %v971 = vsub.s32 0, %v748
        %v972 = vsel %vm970, %v971, %v748
        %v973 = vshrl.u32 %v972, 4
        %v974 = vand.u32 %v972, 15
        %v975 = vsub.s32 0, %v974
        %v976 = vsel %vm970, %v975, %v974
        %vm977 = vcmp.lt.s32.totalorder %v749, 0
        %v978 = vsub.s32 0, %v749
        %v979 = vsel %vm977, %v978, %v749
        %v980 = vshrl.u32 %v979, 4
        %v981 = vand.u32 %v979, 15
        %v982 = vsub.s32 0, %v981
        %v983 = vsel %vm977, %v982, %v981
        %vm984 = vcmp.lt.s32.totalorder %v750, 0
        %v985 = vsub.s32 0, %v750
        %v986 = vsel %vm984, %v985, %v750
        %v987 = vshrl.u32 %v986, 4
        %v988 = vand.u32 %v986, 15
        %v989 = vsub.s32 0, %v988
        %v990 = vsel %vm984, %v989, %v988
        %vm991 = vcmp.lt.s32.totalorder %v751, 0
        %v992 = vsub.s32 0, %v751
        %v993 = vsel %vm991, %v992, %v751
        %v994 = vshrl.u32 %v993, 4
        %v995 = vand.u32 %v993, 15
        %v996 = vsub.s32 0, %v995
        %v997 = vsel %vm991, %v996, %v995
        %vm998 = vcmp.lt.s32.totalorder %v752, 0
        %v999 = vsub.s32 0, %v752
        %v1000 = vsel %vm998, %v999, %v752
        %v1001 = vshrl.u32 %v1000, 4
        %v1002 = vand.u32 %v1000, 15
        %v1003 = vsub.s32 0, %v1002
        %v1004 = vsel %vm998, %v1003, %v1002
        %vm1005 = vcmp.lt.s32.totalorder %v753, 0
        %v1006 = vsub.s32 0, %v753
        %v1007 = vsel %vm1005, %v1006, %v753
        %v1008 = vshrl.u32 %v1007, 4
        %v1009 = vand.u32 %v1007, 15
        %v1010 = vsub.s32 0, %v1009
        %v1011 = vsel %vm1005, %v1010, %v1009
        %vm1012 = vcmp.lt.s32.totalorder %v754, 0
        %v1013 = vsub.s32 0, %v754
        %v1014 = vsel %vm1012, %v1013, %v754
        %v1015 = vshrl.u32 %v1014, 4
        %v1016 = vand.u32 %v1014, 15
        %v1017 = vsub.s32 0, %v1016
        %v1018 = vsel %vm1012, %v1017, %v1016
        %vm1019 = vcmp.lt.s32.totalorder %v755, 0
        %v1020 = vsub.s32 0, %v755
        %v1021 = vsel %vm1019, %v1020, %v755
        %v1022 = vshrl.u32 %v1021, 4
        %v1023 = vand.u32 %v1021, 15
        %v1024 = vsub.s32 0, %v1023
        %v1025 = vsel %vm1019, %v1024, %v1023
        %vm1026 = vcmp.lt.s32.totalorder %v756, 0
        %v1027 = vsub.s32 0, %v756
        %v1028 = vsel %vm1026, %v1027, %v756
        %v1029 = vshrl.u32 %v1028, 4
        %v1030 = vand.u32 %v1028, 15
        %v1031 = vsub.s32 0, %v1030
        %v1032 = vsel %vm1026, %v1031, %v1030
        %vm1033 = vcmp.lt.s32.totalorder %v757, 0
        %v1034 = vsub.s32 0, %v757
        %v1035 = vsel %vm1033, %v1034, %v757
        %v1036 = vshrl.u32 %v1035, 4
        %v1037 = vand.u32 %v1035, 15
        %v1038 = vsub.s32 0, %v1037
        %v1039 = vsel %vm1033, %v1038, %v1037
        %vm1040 = vcmp.lt.s32.totalorder %v758, 0
        %v1041 = vsub.s32 0, %v758
        %v1042 = vsel %vm1040, %v1041, %v758
        %v1043 = vshrl.u32 %v1042, 4
        %v1044 = vand.u32 %v1042, 15
        %v1045 = vsub.s32 0, %v1044
        %v1046 = vsel %vm1040, %v1045, %v1044
        %vm1047 = vcmp.lt.s32.totalorder %v759, 0
        %v1048 = vsub.s32 0, %v759
        %v1049 = vsel %vm1047, %v1048, %v759
        %v1050 = vshrl.u32 %v1049, 4
        %v1051 = vand.u32 %v1049, 15
        %v1052 = vsub.s32 0, %v1051
        %v1053 = vsel %vm1047, %v1052, %v1051
        %vm1054 = vcmp.lt.s32.totalorder %v760, 0
        %v1055 = vsub.s32 0, %v760
        %v1056 = vsel %vm1054, %v1055, %v760
        %v1057 = vshrl.u32 %v1056, 4
        %v1058 = vand.u32 %v1056, 15
        %v1059 = vsub.s32 0, %v1058
        %v1060 = vsel %vm1054, %v1059, %v1058
        %vm1061 = vcmp.lt.s32.totalorder %v761, 0
        %v1062 = vsub.s32 0, %v761
        %v1063 = vsel %vm1061, %v1062, %v761
        %v1064 = vshrl.u32 %v1063, 4
        %v1065 = vand.u32 %v1063, 15
        %v1066 = vsub.s32 0, %v1065
        %v1067 = vsel %vm1061, %v1066, %v1065
        %vm1068 = vcmp.ne.s32.totalorder %v934, 0
        %vm1069 = vcmp.ne.s32.totalorder %v941, 0
        %vm1070 = vcmp.ne.s32.totalorder %v948, 0
        %vm1071 = vcmp.ne.s32.totalorder %v955, 0
        %vm1072 = vcmp.ne.s32.totalorder %v962, 0
        %vm1073 = vcmp.ne.s32.totalorder %v969, 0
        %vm1074 = vcmp.ne.s32.totalorder %v976, 0
        %vm1075 = vcmp.ne.s32.totalorder %v983, 0
        %vm1076 = vcmp.ne.s32.totalorder %v990, 0
        %vm1077 = vcmp.ne.s32.totalorder %v997, 0
        %vm1078 = vcmp.ne.s32.totalorder %v1004, 0
        %vm1079 = vcmp.ne.s32.totalorder %v1011, 0
        %vm1080 = vcmp.ne.s32.totalorder %v1018, 0
        %vm1081 = vcmp.ne.s32.totalorder %v1025, 0
        %vm1082 = vcmp.ne.s32.totalorder %v1032, 0
        %vm1083 = vcmp.ne.s32.totalorder %v1039, 0
        %vm1084 = vcmp.ne.s32.totalorder %v1046, 0
        %vm1085 = vcmp.ne.s32.totalorder %v1053, 0
        %vm1086 = vcmp.ne.s32.totalorder %v1060, 0
        %vm1087 = vcmp.ne.s32.totalorder %v1067, 0
        %vm1088 = vcmp.lt.s32.totalorder %v934, 0
        %vm1089 = vcmp.lt.s32.totalorder %v941, 0
        %vm1090 = vcmp.lt.s32.totalorder %v948, 0
        %vm1091 = vcmp.lt.s32.totalorder %v955, 0
        %vm1092 = vcmp.lt.s32.totalorder %v962, 0
        %vm1093 = vcmp.lt.s32.totalorder %v969, 0
        %vm1094 = vcmp.lt.s32.totalorder %v976, 0
        %vm1095 = vcmp.lt.s32.totalorder %v983, 0
        %vm1096 = vcmp.lt.s32.totalorder %v990, 0
        %vm1097 = vcmp.lt.s32.totalorder %v997, 0
        %vm1098 = vcmp.lt.s32.totalorder %v1004, 0
        %vm1099 = vcmp.lt.s32.totalorder %v1011, 0
        %vm1100 = vcmp.lt.s32.totalorder %v1018, 0
        %vm1101 = vcmp.lt.s32.totalorder %v1025, 0
        %vm1102 = vcmp.lt.s32.totalorder %v1032, 0
        %vm1103 = vcmp.lt.s32.totalorder %v1039, 0
        %vm1104 = vcmp.lt.s32.totalorder %v1046, 0
        %vm1105 = vcmp.lt.s32.totalorder %v1053, 0
        %vm1106 = vcmp.lt.s32.totalorder %v1060, 0
        %vm1107 = vcmp.lt.s32.totalorder %v1067, 0
        %vm1108 = vmand %vm1088, %vm1068
        %vm1109 = vmand %vm1089, %vm1069
        %vm1110 = vmand %vm1090, %vm1070
        %vm1111 = vmand %vm1091, %vm1071
        %vm1112 = vmand %vm1092, %vm1072
        %vm1113 = vmand %vm1093, %vm1073
        %vm1114 = vmand %vm1094, %vm1074
        %vm1115 = vmand %vm1095, %vm1075
        %vm1116 = vmand %vm1096, %vm1076
        %vm1117 = vmand %vm1097, %vm1077
        %vm1118 = vmand %vm1098, %vm1078
        %vm1119 = vmand %vm1099, %vm1079
        %vm1120 = vmand %vm1100, %vm1080
        %vm1121 = vmand %vm1101, %vm1081
        %vm1122 = vmand %vm1102, %vm1082
        %vm1123 = vmand %vm1103, %vm1083
        %vm1124 = vmand %vm1104, %vm1084
        %vm1125 = vmand %vm1105, %vm1085
        %vm1126 = vmand %vm1106, %vm1086
        %vm1127 = vmand %vm1107, %vm1087
        %v1128 = vadd.s32 %v934, 16
        %v1129 = vadd.s32 %v941, 16
        %v1130 = vadd.s32 %v948, 16
        %v1131 = vadd.s32 %v955, 16
        %v1132 = vadd.s32 %v962, 16
        %v1133 = vadd.s32 %v969, 16
        %v1134 = vadd.s32 %v976, 16
        %v1135 = vadd.s32 %v983, 16
        %v1136 = vadd.s32 %v990, 16
        %v1137 = vadd.s32 %v997, 16
        %v1138 = vadd.s32 %v1004, 16
        %v1139 = vadd.s32 %v1011, 16
        %v1140 = vadd.s32 %v1018, 16
        %v1141 = vadd.s32 %v1025, 16
        %v1142 = vadd.s32 %v1032, 16
        %v1143 = vadd.s32 %v1039, 16
        %v1144 = vadd.s32 %v1046, 16
        %v1145 = vadd.s32 %v1053, 16
        %v1146 = vadd.s32 %v1060, 16
        %v1147 = vadd.s32 %v1067, 16
        %v1148 = vsel %vm1108, %v1128, %v934
        %v1149 = vsel %vm1109, %v1129, %v941
        %v1150 = vsel %vm1110, %v1130, %v948
        %v1151 = vsel %vm1111, %v1131, %v955
        %v1152 = vsel %vm1112, %v1132, %v962
        %v1153 = vsel %vm1113, %v1133, %v969
        %v1154 = vsel %vm1114, %v1134, %v976
        %v1155 = vsel %vm1115, %v1135, %v983
        %v1156 = vsel %vm1116, %v1136, %v990
        %v1157 = vsel %vm1117, %v1137, %v997
        %v1158 = vsel %vm1118, %v1138, %v1004
        %v1159 = vsel %vm1119, %v1139, %v1011
        %v1160 = vsel %vm1120, %v1140, %v1018
        %v1161 = vsel %vm1121, %v1141, %v1025
        %v1162 = vsel %vm1122, %v1142, %v1032
        %v1163 = vsel %vm1123, %v1143, %v1039
        %v1164 = vsel %vm1124, %v1144, %v1046
        %v1165 = vsel %vm1125, %v1145, %v1053
        %v1166 = vsel %vm1126, %v1146, %v1060
        %v1167 = vsel %vm1127, %v1147, %v1067
        %vm1168 = vcmp.gt.s32.totalorder %v1148, 0
        %vm1169 = vcmp.gt.s32.totalorder %v1149, 0
        %vm1170 = vcmp.gt.s32.totalorder %v1150, 0
        %vm1171 = vcmp.gt.s32.totalorder %v1151, 0
        %vm1172 = vcmp.gt.s32.totalorder %v1152, 0
        %vm1173 = vcmp.gt.s32.totalorder %v1153, 0
        %vm1174 = vcmp.gt.s32.totalorder %v1154, 0
        %vm1175 = vcmp.gt.s32.totalorder %v1155, 0
        %vm1176 = vcmp.gt.s32.totalorder %v1156, 0
        %vm1177 = vcmp.gt.s32.totalorder %v1157, 0
        %vm1178 = vcmp.gt.s32.totalorder %v1158, 0
        %vm1179 = vcmp.gt.s32.totalorder %v1159, 0
        %vm1180 = vcmp.gt.s32.totalorder %v1160, 0
        %vm1181 = vcmp.gt.s32.totalorder %v1161, 0
        %vm1182 = vcmp.gt.s32.totalorder %v1162, 0
        %vm1183 = vcmp.gt.s32.totalorder %v1163, 0
        %vm1184 = vcmp.gt.s32.totalorder %v1164, 0
        %vm1185 = vcmp.gt.s32.totalorder %v1165, 0
        %vm1186 = vcmp.gt.s32.totalorder %v1166, 0
        %vm1187 = vcmp.gt.s32.totalorder %v1167, 0
        %v1188 = vrot.slane %v908, 7
        %v1189 = vrot.slane %v909, 7
        %v1190 = vrot.slane %v910, 7
        %v1191 = vrot.slane %v911, 7
        %v1192 = vrot.slane %v912, 7
        %v1193 = vrot.slane %v913, 7
        %v1194 = vrot.slane %v914, 7
        %v1195 = vrot.slane %v915, 7
        %v1196 = vrot.slane %v916, 7
        %v1197 = vrot.slane %v917, 7
        %v1198 = vrot.slane %v918, 7
        %v1199 = vrot.slane %v919, 7
        %v1200 = vrot.slane %v920, 7
        %v1201 = vrot.slane %v921, 7
        %v1202 = vrot.slane %v922, 7
        %v1203 = vrot.slane %v923, 7
        %v1204 = vrot.slane %v924, 7
        %v1205 = vrot.slane %v925, 7
        %v1206 = vrot.slane %v926, 7
        %v1207 = vrot.slane %v927, 7
        %vm1208 = vcmp.lt.s32.totalorder %v742, 1
        %v1209 = vsel %vm1208, %v1206, %v1207
        %v1210 = vsel %vm1208, %v1205, %v1206
        %v1211 = vsel %vm1208, %v1204, %v1205
        %v1212 = vsel %vm1208, %v1203, %v1204
        %v1213 = vsel %vm1208, %v1202, %v1203
        %v1214 = vsel %vm1208, %v1201, %v1202
        %v1215 = vsel %vm1208, %v1200, %v1201
        %v1216 = vsel %vm1208, %v1199, %v1200
        %v1217 = vsel %vm1208, %v1198, %v1199
        %v1218 = vsel %vm1208, %v1197, %v1198
        %v1219 = vsel %vm1208, %v1196, %v1197
        %v1220 = vsel %vm1208, %v1195, %v1196
        %v1221 = vsel %vm1208, %v1194, %v1195
        %v1222 = vsel %vm1208, %v1193, %v1194
        %v1223 = vsel %vm1208, %v1192, %v1193
        %v1224 = vsel %vm1208, %v1191, %v1192
        %v1225 = vsel %vm1208, %v1190, %v1191
        %v1226 = vsel %vm1208, %v1189, %v1190
        %v1227 = vsel %vm1208, %v1188, %v1189
        %v1228 = vsel %vm1208, %v1207, %v1188
        %v1229 = vsel %vm1168, 1, 0
        %v1230 = vsel %vm1169, 1, 0
        %v1231 = vsel %vm1170, 1, 0
        %v1232 = vsel %vm1171, 1, 0
        %v1233 = vsel %vm1172, 1, 0
        %v1234 = vsel %vm1173, 1, 0
        %v1235 = vsel %vm1174, 1, 0
        %v1236 = vsel %vm1175, 1, 0
        %v1237 = vsel %vm1176, 1, 0
        %v1238 = vsel %vm1177, 1, 0
        %v1239 = vsel %vm1178, 1, 0
        %v1240 = vsel %vm1179, 1, 0
        %v1241 = vsel %vm1180, 1, 0
        %v1242 = vsel %vm1181, 1, 0
        %v1243 = vsel %vm1182, 1, 0
        %v1244 = vsel %vm1183, 1, 0
        %v1245 = vsel %vm1184, 1, 0
        %v1246 = vsel %vm1185, 1, 0
        %v1247 = vsel %vm1186, 1, 0
        %v1248 = vsel %vm1187, 1, 0
        %vm1249 = vcmp.eq.s32.totalorder %v1229, 1
        %vm1250 = vcmp.eq.s32.totalorder %v1230, 1
        %vm1251 = vcmp.eq.s32.totalorder %v1231, 1
        %vm1252 = vcmp.eq.s32.totalorder %v1232, 1
        %vm1253 = vcmp.eq.s32.totalorder %v1233, 1
        %vm1254 = vcmp.eq.s32.totalorder %v1234, 1
        %vm1255 = vcmp.eq.s32.totalorder %v1235, 1
        %vm1256 = vcmp.eq.s32.totalorder %v1236, 1
        %vm1257 = vcmp.eq.s32.totalorder %v1237, 1
        %vm1258 = vcmp.eq.s32.totalorder %v1238, 1
        %vm1259 = vcmp.eq.s32.totalorder %v1239, 1
        %vm1260 = vcmp.eq.s32.totalorder %v1240, 1
        %vm1261 = vcmp.eq.s32.totalorder %v1241, 1
        %vm1262 = vcmp.eq.s32.totalorder %v1242, 1
        %vm1263 = vcmp.eq.s32.totalorder %v1243, 1
        %vm1264 = vcmp.eq.s32.totalorder %v1244, 1
        %vm1265 = vcmp.eq.s32.totalorder %v1245, 1
        %vm1266 = vcmp.eq.s32.totalorder %v1246, 1
        %vm1267 = vcmp.eq.s32.totalorder %v1247, 1
        %vm1268 = vcmp.eq.s32.totalorder %v1248, 1
        %v1269 = vsel %vm1249, %v1228, 0.0
        %v1270 = vsel %vm1250, %v1227, 0.0
        %v1271 = vsel %vm1251, %v1226, 0.0
        %v1272 = vsel %vm1252, %v1225, 0.0
        %v1273 = vsel %vm1253, %v1224, 0.0
        %v1274 = vsel %vm1254, %v1223, 0.0
        %v1275 = vsel %vm1255, %v1222, 0.0
        %v1276 = vsel %vm1256, %v1221, 0.0
        %v1277 = vsel %vm1257, %v1220, 0.0
        %v1278 = vsel %vm1258, %v1219, 0.0
        %v1279 = vsel %vm1259, %v1218, 0.0
        %v1280 = vsel %vm1260, %v1217, 0.0
        %v1281 = vsel %vm1261, %v1216, 0.0
        %v1282 = vsel %vm1262, %v1215, 0.0
        %v1283 = vsel %vm1263, %v1214, 0.0
        %v1284 = vsel %vm1264, %v1213, 0.0
        %v1285 = vsel %vm1265, %v1212, 0.0
        %v1286 = vsel %vm1266, %v1211, 0.0
        %v1287 = vsel %vm1267, %v1210, 0.0
        %v1288 = vsel %vm1268, %v1209, 0.0
        %vm1289 = vcmp.lt.s32.totalorder %v1148, 15
        %vm1290 = vcmp.lt.s32.totalorder %v1149, 15
        %vm1291 = vcmp.lt.s32.totalorder %v1150, 15
        %vm1292 = vcmp.lt.s32.totalorder %v1151, 15
        %vm1293 = vcmp.lt.s32.totalorder %v1152, 15
        %vm1294 = vcmp.lt.s32.totalorder %v1153, 15
        %vm1295 = vcmp.lt.s32.totalorder %v1154, 15
        %vm1296 = vcmp.lt.s32.totalorder %v1155, 15
        %vm1297 = vcmp.lt.s32.totalorder %v1156, 15
        %vm1298 = vcmp.lt.s32.totalorder %v1157, 15
        %vm1299 = vcmp.lt.s32.totalorder %v1158, 15
        %vm1300 = vcmp.lt.s32.totalorder %v1159, 15
        %vm1301 = vcmp.lt.s32.totalorder %v1160, 15
        %vm1302 = vcmp.lt.s32.totalorder %v1161, 15
        %vm1303 = vcmp.lt.s32.totalorder %v1162, 15
        %vm1304 = vcmp.lt.s32.totalorder %v1163, 15
        %vm1305 = vcmp.lt.s32.totalorder %v1164, 15
        %vm1306 = vcmp.lt.s32.totalorder %v1165, 15
        %vm1307 = vcmp.lt.s32.totalorder %v1166, 15
        %vm1308 = vcmp.lt.s32.totalorder %v1167, 15
        %v1309 = vrot.slane %v908, 1
        %v1310 = vrot.slane %v909, 1
        %v1311 = vrot.slane %v910, 1
        %v1312 = vrot.slane %v911, 1
        %v1313 = vrot.slane %v912, 1
        %v1314 = vrot.slane %v913, 1
        %v1315 = vrot.slane %v914, 1
        %v1316 = vrot.slane %v915, 1
        %v1317 = vrot.slane %v916, 1
        %v1318 = vrot.slane %v917, 1
        %v1319 = vrot.slane %v918, 1
        %v1320 = vrot.slane %v919, 1
        %v1321 = vrot.slane %v920, 1
        %v1322 = vrot.slane %v921, 1
        %v1323 = vrot.slane %v922, 1
        %v1324 = vrot.slane %v923, 1
        %v1325 = vrot.slane %v924, 1
        %v1326 = vrot.slane %v925, 1
        %v1327 = vrot.slane %v926, 1
        %v1328 = vrot.slane %v927, 1
        %vm1329 = vcmp.lt.s32.totalorder %v742, 7
        %v1330 = vsel %vm1329, %v1327, %v1328
        %v1331 = vsel %vm1329, %v1326, %v1327
        %v1332 = vsel %vm1329, %v1325, %v1326
        %v1333 = vsel %vm1329, %v1324, %v1325
        %v1334 = vsel %vm1329, %v1323, %v1324
        %v1335 = vsel %vm1329, %v1322, %v1323
        %v1336 = vsel %vm1329, %v1321, %v1322
        %v1337 = vsel %vm1329, %v1320, %v1321
        %v1338 = vsel %vm1329, %v1319, %v1320
        %v1339 = vsel %vm1329, %v1318, %v1319
        %v1340 = vsel %vm1329, %v1317, %v1318
        %v1341 = vsel %vm1329, %v1316, %v1317
        %v1342 = vsel %vm1329, %v1315, %v1316
        %v1343 = vsel %vm1329, %v1314, %v1315
        %v1344 = vsel %vm1329, %v1313, %v1314
        %v1345 = vsel %vm1329, %v1312, %v1313
        %v1346 = vsel %vm1329, %v1311, %v1312
        %v1347 = vsel %vm1329, %v1310, %v1311
        %v1348 = vsel %vm1329, %v1309, %v1310
        %v1349 = vsel %vm1329, %v1328, %v1309
        %v1350 = vsel %vm1289, 1, 0
        %v1351 = vsel %vm1290, 1, 0
        %v1352 = vsel %vm1291, 1, 0
        %v1353 = vsel %vm1292, 1, 0
        %v1354 = vsel %vm1293, 1, 0
        %v1355 = vsel %vm1294, 1, 0
        %v1356 = vsel %vm1295, 1, 0
        %v1357 = vsel %vm1296, 1, 0
        %v1358 = vsel %vm1297, 1, 0
        %v1359 = vsel %vm1298, 1, 0
        %v1360 = vsel %vm1299, 1, 0
        %v1361 = vsel %vm1300, 1, 0
        %v1362 = vsel %vm1301, 1, 0
        %v1363 = vsel %vm1302, 1, 0
        %v1364 = vsel %vm1303, 1, 0
        %v1365 = vsel %vm1304, 1, 0
        %v1366 = vsel %vm1305, 1, 0
        %v1367 = vsel %vm1306, 1, 0
        %v1368 = vsel %vm1307, 1, 0
        %v1369 = vsel %vm1308, 1, 0
        %vm1370 = vcmp.eq.s32.totalorder %v1350, 1
        %vm1371 = vcmp.eq.s32.totalorder %v1351, 1
        %vm1372 = vcmp.eq.s32.totalorder %v1352, 1
        %vm1373 = vcmp.eq.s32.totalorder %v1353, 1
        %vm1374 = vcmp.eq.s32.totalorder %v1354, 1
        %vm1375 = vcmp.eq.s32.totalorder %v1355, 1
        %vm1376 = vcmp.eq.s32.totalorder %v1356, 1
        %vm1377 = vcmp.eq.s32.totalorder %v1357, 1
        %vm1378 = vcmp.eq.s32.totalorder %v1358, 1
        %vm1379 = vcmp.eq.s32.totalorder %v1359, 1
        %vm1380 = vcmp.eq.s32.totalorder %v1360, 1
        %vm1381 = vcmp.eq.s32.totalorder %v1361, 1
        %vm1382 = vcmp.eq.s32.totalorder %v1362, 1
        %vm1383 = vcmp.eq.s32.totalorder %v1363, 1
        %vm1384 = vcmp.eq.s32.totalorder %v1364, 1
        %vm1385 = vcmp.eq.s32.totalorder %v1365, 1
        %vm1386 = vcmp.eq.s32.totalorder %v1366, 1
        %vm1387 = vcmp.eq.s32.totalorder %v1367, 1
        %vm1388 = vcmp.eq.s32.totalorder %v1368, 1
        %vm1389 = vcmp.eq.s32.totalorder %v1369, 1
        %v1390 = vsel %vm1370, %v1348, 0.0
        %v1391 = vsel %vm1371, %v1347, 0.0
        %v1392 = vsel %vm1372, %v1346, 0.0
        %v1393 = vsel %vm1373, %v1345, 0.0
        %v1394 = vsel %vm1374, %v1344, 0.0
        %v1395 = vsel %vm1375, %v1343, 0.0
        %v1396 = vsel %vm1376, %v1342, 0.0
        %v1397 = vsel %vm1377, %v1341, 0.0
        %v1398 = vsel %vm1378, %v1340, 0.0
        %v1399 = vsel %vm1379, %v1339, 0.0
        %v1400 = vsel %vm1380, %v1338, 0.0
        %v1401 = vsel %vm1381, %v1337, 0.0
        %v1402 = vsel %vm1382, %v1336, 0.0
        %v1403 = vsel %vm1383, %v1335, 0.0
        %v1404 = vsel %vm1384, %v1334, 0.0
        %v1405 = vsel %vm1385, %v1333, 0.0
        %v1406 = vsel %vm1386, %v1332, 0.0
        %v1407 = vsel %vm1387, %v1331, 0.0
        %v1408 = vsel %vm1388, %v1330, 0.0
        %v1409 = vsel %vm1389, %v1349, 0.0
        %v1410 = vpack.c.bf16 %v1270, %v1269
        %v1411 = vpack.c.bf16 %v1272, %v1271
        %v1412 = vpack.c.bf16 %v1274, %v1273
        %v1413 = vpack.c.bf16 %v1276, %v1275
        %v1414 = vpack.c.bf16 %v1278, %v1277
        %v1415 = vpack.c.bf16 %v1280, %v1279
        %v1416 = vpack.c.bf16 %v1282, %v1281
        %v1417 = vpack.c.bf16 %v1284, %v1283
        %v1418 = vpack.c.bf16 %v1286, %v1285
        %v1419 = vpack.c.bf16 %v1288, %v1287
        %v1420 = vpack.c.bf16 %v909, %v908
        %v1421 = vpack.c.bf16 %v911, %v910
        %v1422 = vpack.c.bf16 %v913, %v912
        %v1423 = vpack.c.bf16 %v915, %v914
        %v1424 = vpack.c.bf16 %v917, %v916
        %v1425 = vpack.c.bf16 %v919, %v918
        %v1426 = vpack.c.bf16 %v921, %v920
        %v1427 = vpack.c.bf16 %v923, %v922
        %v1428 = vpack.c.bf16 %v925, %v924
        %v1429 = vpack.c.bf16 %v927, %v926
        %v1430 = vpack.c.bf16 %v1391, %v1390
        %v1431 = vpack.c.bf16 %v1393, %v1392
        %v1432 = vpack.c.bf16 %v1395, %v1394
        %v1433 = vpack.c.bf16 %v1397, %v1396
        %v1434 = vpack.c.bf16 %v1399, %v1398
        %v1435 = vpack.c.bf16 %v1401, %v1400
        %v1436 = vpack.c.bf16 %v1403, %v1402
        %v1437 = vpack.c.bf16 %v1405, %v1404
        %v1438 = vpack.c.bf16 %v1407, %v1406
        %v1439 = vpack.c.bf16 %v1409, %v1408
        %1450 = vrot.lane.b32.xlu0 %v1420, 4
        %v1451 = vpop.permute.xlu0 %1450
        %1452 = vrot.lane.b32.xlu0 %v1421, 4
        %v1453 = vpop.permute.xlu0 %1452
        %1454 = vrot.lane.b32.xlu0 %v1422, 4
        %v1455 = vpop.permute.xlu0 %1454
        %1456 = vrot.lane.b32.xlu0 %v1423, 4
        %v1457 = vpop.permute.xlu0 %1456
        %1458 = vrot.lane.b32.xlu0 %v1424, 4
        %v1459 = vpop.permute.xlu0 %1458
        %1460 = vrot.lane.b32.xlu0 %v1425, 4
        %v1461 = vpop.permute.xlu0 %1460
        %1462 = vrot.lane.b32.xlu0 %v1426, 4
        %v1463 = vpop.permute.xlu0 %1462
        %1464 = vrot.lane.b32.xlu0 %v1427, 4
        %v1465 = vpop.permute.xlu0 %1464
        %1466 = vrot.lane.b32.xlu0 %v1428, 4
        %v1467 = vpop.permute.xlu0 %1466
        %1468 = vrot.lane.b32.xlu0 %v1429, 4
        %v1469 = vpop.permute.xlu0 %1468
        %1480 = vrot.lane.b32.xlu0 %v1430, 8
        %v1481 = vpop.permute.xlu0 %1480
        %1482 = vrot.lane.b32.xlu0 %v1431, 8
        %v1483 = vpop.permute.xlu0 %1482
        %1484 = vrot.lane.b32.xlu0 %v1432, 8
        %v1485 = vpop.permute.xlu0 %1484
        %1486 = vrot.lane.b32.xlu0 %v1433, 8
        %v1487 = vpop.permute.xlu0 %1486
        %1488 = vrot.lane.b32.xlu0 %v1434, 8
        %v1489 = vpop.permute.xlu0 %1488
        %1490 = vrot.lane.b32.xlu0 %v1435, 8
        %v1491 = vpop.permute.xlu0 %1490
        %1492 = vrot.lane.b32.xlu0 %v1436, 8
        %v1493 = vpop.permute.xlu0 %1492
        %1494 = vrot.lane.b32.xlu0 %v1437, 8
        %v1495 = vpop.permute.xlu0 %1494
        %1496 = vrot.lane.b32.xlu0 %v1438, 8
        %v1497 = vpop.permute.xlu0 %1496
        %1498 = vrot.lane.b32.xlu0 %v1439, 8
        %v1499 = vpop.permute.xlu0 %1498
        %vm1500 = vcmask 31744
        %v1503 = vsel %vm1500, %v1410, %v1451
        %v1506 = vsel %vm1500, %v1411, %v1453
        %v1509 = vsel %vm1500, %v1412, %v1455
        %v1512 = vsel %vm1500, %v1413, %v1457
        %v1515 = vsel %vm1500, %v1414, %v1459
        %v1518 = vsel %vm1500, %v1415, %v1461
        %v1521 = vsel %vm1500, %v1416, %v1463
        %v1524 = vsel %vm1500, %v1417, %v1465
        %v1527 = vsel %vm1500, %v1418, %v1467
        %v1530 = vsel %vm1500, %v1419, %v1469
        %vm1531 = vcmask 64512
        %v1533 = vsel %vm1531, %v1503, %v1481
        %v1535 = vsel %vm1531, %v1506, %v1483
        %v1537 = vsel %vm1531, %v1509, %v1485
        %v1539 = vsel %vm1531, %v1512, %v1487
        %v1541 = vsel %vm1531, %v1515, %v1489
        %v1543 = vsel %vm1531, %v1518, %v1491
        %v1545 = vsel %vm1531, %v1521, %v1493
        %v1547 = vsel %vm1531, %v1524, %v1495
        %v1549 = vsel %vm1531, %v1527, %v1497
        %v1551 = vsel %vm1531, %v1530, %v1499
        %v1552 = vld [vmem:[%s5] sm:$0xf]
        %v1553 = vld [vmem:[%s5 + $0x4] sm:$0x3]
        %s1554 = scalar_lea.vmem %s5, 8
        %v1555 = vld [vmem:[%s1554] sm:$0xf]
        %v1556 = vld [vmem:[%s1554 + $0x4] sm:$0x3]
        %v1559 = vunpack.c.l.b16 %v1555
        %v1560 = vunpack.c.l.b16 %v1556
        %v1561 = vpack.c.b16 %v1560, %v1559
        %vm1562 = vcmask 97280
        %v1563 = vsel %vm1562, %v1535, 0
        %v1565 = vsel %vm1562, %v1537, 0
        %v1567 = vsel %vm1562, %v1539, 0
        %v1569 = vsel %vm1562, %v1541, 0
        %v1571 = vsel %vm1562, %v1543, 0
        %v1573 = vsel %vm1562, %v1545, 0
        %v1575 = vsel %vm1562, %v1547, 0
        %v1577 = vsel %vm1562, %v1549, 0
        %vm1579 = vcmask 1045504
        %v1581 = vsel %vm1579, %v1561, 0
        %1583 = vmatprep.subr.bf16.mxu0 0
        %1584 = vmatpush1.bf16.msra.mxu0 %v1581
        %1585 = vmatprep.subr.bf16.mxu0 0
        %1586 = vmatpush1.bf16.msra.mxu0 0
        %1587 = vmatprep.subr.bf16.mxu0 0
        %1588 = vmatpush1.bf16.msra.mxu0 0
        %1589 = vmatprep.subr.bf16.mxu0 0
        %1590 = vmatpush1.bf16.msra.mxu0 0
        %1591 = vmatprep.subr.bf16.mxu0 0
        %1592 = vmatpush1.bf16.msra.mxu0 0
        %1593 = vmatprep.subr.bf16.mxu0 0
        %1594 = vmatpush1.bf16.msra.mxu0 0
        %1595 = vmatprep.subr.bf16.mxu0 0
        %1596 = vmatpush1.bf16.msra.mxu0 0
        %1597 = vmatprep.subr.bf16.mxu0 0
        %1598 = vmatpush1.bf16.msra.mxu0 0
        %1599 = vmatprep.subr.bf16.mxu0 0
        %1600 = vmatpush1.bf16.msra.mxu0 0
        %1601 = vmatprep.subr.bf16.mxu0 0
        %1602 = vmatpush1.bf16.msra.mxu0 0
        %1603 = vmatprep.subr.bf16.mxu0 0
        %1604 = vmatpush1.bf16.msra.mxu0 0
        %1605 = vmatprep.subr.bf16.mxu0 0
        %1606 = vmatpush1.bf16.msra.mxu0 0
        %1607 = vmatprep.subr.bf16.mxu0 0
        %1608 = vmatpush1.bf16.msra.mxu0 0
        %1609 = vmatprep.subr.bf16.mxu0 0
        %1610 = vmatpush1.bf16.msra.mxu0 0
        %1611 = vmatprep.subr.bf16.mxu0 0
        %1612 = vmatpush1.bf16.msra.mxu0 0
        %1613 = vmatprep.subr.bf16.mxu0 0
        %1614 = vmatpush1.bf16.msra.mxu0 0
        %1615 = vmatprep.mubr.bf16.mxu0 0
        %1616 = vmatmul.mubr.bf16.gmra.mrb[0].mxu0 %v1563
        %v1617 = vpop.f32.mrb[0].mxu0
        %v1618 = vadd.f32 0.0, %v1617
        %v1619 = vpop.f32.mrb[0].mxu0
        %v1620 = vpop.f32.mrb[0].mxu0
        %v1621 = vadd.f32 0.0, %v1620
        %v1622 = vpop.f32.mrb[0].mxu0
        %1623 = vmatprep.mubr.bf16.mxu0 0
        %1624 = vmatmul.mubr.bf16.gmra.mrb[0].mxu0 %v1565
        %v1625 = vpop.f32.mrb[0].mxu0
        %v1626 = vadd.f32 0.0, %v1625
        %v1627 = vpop.f32.mrb[0].mxu0
        %v1628 = vpop.f32.mrb[0].mxu0
        %v1629 = vadd.f32 0.0, %v1628
        %v1630 = vpop.f32.mrb[0].mxu0
        %1631 = vmatprep.mubr.bf16.mxu0 0
        %1632 = vmatmul.mubr.bf16.gmra.mrb[0].mxu0 %v1567
        %v1633 = vpop.f32.mrb[0].mxu0
        %v1634 = vadd.f32 0.0, %v1633
        %v1635 = vpop.f32.mrb[0].mxu0
        %v1636 = vpop.f32.mrb[0].mxu0
        %v1637 = vadd.f32 0.0, %v1636
        %v1638 = vpop.f32.mrb[0].mxu0
        %1639 = vmatprep.mubr.bf16.mxu0 0
        %1640 = vmatmul.mubr.bf16.gmra.mrb[0].mxu0 %v1569
        %v1641 = vpop.f32.mrb[0].mxu0
        %v1642 = vadd.f32 0.0, %v1641
        %v1643 = vpop.f32.mrb[0].mxu0
        %v1644 = vpop.f32.mrb[0].mxu0
        %v1645 = vadd.f32 0.0, %v1644
        %v1646 = vpop.f32.mrb[0].mxu0
        %1647 = vmatprep.mubr.bf16.mxu0 0
        %1648 = vmatmul.mubr.bf16.gmra.mrb[0].mxu0 %v1571
        %v1649 = vpop.f32.mrb[0].mxu0
        %v1650 = vadd.f32 0.0, %v1649
        %v1651 = vpop.f32.mrb[0].mxu0
        %v1652 = vpop.f32.mrb[0].mxu0
        %v1653 = vadd.f32 0.0, %v1652
        %v1654 = vpop.f32.mrb[0].mxu0
        %1655 = vmatprep.mubr.bf16.mxu0 0
        %1656 = vmatmul.mubr.bf16.gmra.mrb[0].mxu0 %v1573
        %v1657 = vpop.f32.mrb[0].mxu0
        %v1658 = vadd.f32 0.0, %v1657
        %v1659 = vpop.f32.mrb[0].mxu0
        %v1660 = vpop.f32.mrb[0].mxu0
        %v1661 = vadd.f32 0.0, %v1660
        %v1662 = vpop.f32.mrb[0].mxu0
        %1663 = vmatprep.mubr.bf16.mxu0 0
        %1664 = vmatmul.mubr.bf16.gmra.mrb[0].mxu0 %v1575
        %v1665 = vpop.f32.mrb[0].mxu0
        %v1666 = vadd.f32 0.0, %v1665
        %v1667 = vpop.f32.mrb[0].mxu0
        %v1668 = vpop.f32.mrb[0].mxu0
        %v1669 = vadd.f32 0.0, %v1668
        %v1670 = vpop.f32.mrb[0].mxu0
        %1671 = vmatprep.mubr.bf16.mxu0 0
        %1672 = vmatmul.mubr.bf16.gmra.mrb[0].mxu0 %v1577
        %v1673 = vpop.f32.mrb[0].mxu0
        %v1674 = vadd.f32 0.0, %v1673
        %v1675 = vpop.f32.mrb[0].mxu0
        %v1676 = vpop.f32.mrb[0].mxu0
        %v1677 = vadd.f32 0.0, %v1676
        %v1678 = vpop.f32.mrb[0].mxu0
        %1679 = vdwg.mxu0
        %v1682 = vunpack.c.l.b16 %v1552
        %v1683 = vunpack.c.l.b16 %v1553
        %v1684 = vpack.c.b16 %v1683, %v1682
        %v1685 = vsel %vm1562, %v1533, 0
        %v1688 = vsel %vm1579, %v1684, 0
        %1690 = vmatprep.subr.bf16.mxu0 0
        %1691 = vmatpush1.bf16.msra.mxu0 %v1688
        %1692 = vmatprep.subr.bf16.mxu0 0
        %1693 = vmatpush1.bf16.msra.mxu0 0
        %1694 = vmatprep.subr.bf16.mxu0 0
        %1695 = vmatpush1.bf16.msra.mxu0 0
        %1696 = vmatprep.subr.bf16.mxu0 0
        %1697 = vmatpush1.bf16.msra.mxu0 0
        %1698 = vmatprep.subr.bf16.mxu0 0
        %1699 = vmatpush1.bf16.msra.mxu0 0
        %1700 = vmatprep.subr.bf16.mxu0 0
        %1701 = vmatpush1.bf16.msra.mxu0 0
        %1702 = vmatprep.subr.bf16.mxu0 0
        %1703 = vmatpush1.bf16.msra.mxu0 0
        %1704 = vmatprep.subr.bf16.mxu0 0
        %1705 = vmatpush1.bf16.msra.mxu0 0
        %1706 = vmatprep.subr.bf16.mxu0 0
        %1707 = vmatpush1.bf16.msra.mxu0 0
        %1708 = vmatprep.subr.bf16.mxu0 0
        %1709 = vmatpush1.bf16.msra.mxu0 0
        %1710 = vmatprep.subr.bf16.mxu0 0
        %1711 = vmatpush1.bf16.msra.mxu0 0
        %1712 = vmatprep.subr.bf16.mxu0 0
        %1713 = vmatpush1.bf16.msra.mxu0 0
        %1714 = vmatprep.subr.bf16.mxu0 0
        %1715 = vmatpush1.bf16.msra.mxu0 0
        %1716 = vmatprep.subr.bf16.mxu0 0
        %1717 = vmatpush1.bf16.msra.mxu0 0
        %1718 = vmatprep.subr.bf16.mxu0 0
        %1719 = vmatpush1.bf16.msra.mxu0 0
        %1720 = vmatprep.subr.bf16.mxu0 0
        %1721 = vmatpush1.bf16.msra.mxu0 0
        %1722 = vmatprep.mubr.bf16.mxu0 0
        %1723 = vmatmul.mubr.bf16.gmra.mrb[0].mxu0 %v1685
        %v1724 = vpop.f32.mrb[0].mxu0
        %v1725 = vadd.f32 %v1618, %v1724
        %v1726 = vpop.f32.mrb[0].mxu0
        %v1727 = vpop.f32.mrb[0].mxu0
        %v1728 = vadd.f32 %v1621, %v1727
        %v1729 = vpop.f32.mrb[0].mxu0
        %1730 = vmatprep.mubr.bf16.mxu0 0
        %1731 = vmatmul.mubr.bf16.gmra.mrb[0].mxu0 %v1563
        %v1732 = vpop.f32.mrb[0].mxu0
        %v1733 = vadd.f32 %v1626, %v1732
        %v1734 = vpop.f32.mrb[0].mxu0
        %v1735 = vpop.f32.mrb[0].mxu0
        %v1736 = vadd.f32 %v1629, %v1735
        %v1737 = vpop.f32.mrb[0].mxu0
        %1738 = vmatprep.mubr.bf16.mxu0 0
        %1739 = vmatmul.mubr.bf16.gmra.mrb[0].mxu0 %v1565
        %v1740 = vpop.f32.mrb[0].mxu0
        %v1741 = vadd.f32 %v1634, %v1740
        %v1742 = vpop.f32.mrb[0].mxu0
        %v1743 = vpop.f32.mrb[0].mxu0
        %v1744 = vadd.f32 %v1637, %v1743
        %v1745 = vpop.f32.mrb[0].mxu0
        %1746 = vmatprep.mubr.bf16.mxu0 0
        %1747 = vmatmul.mubr.bf16.gmra.mrb[0].mxu0 %v1567
        %v1748 = vpop.f32.mrb[0].mxu0
        %v1749 = vadd.f32 %v1642, %v1748
        %v1750 = vpop.f32.mrb[0].mxu0
        %v1751 = vpop.f32.mrb[0].mxu0
        %v1752 = vadd.f32 %v1645, %v1751
        %v1753 = vpop.f32.mrb[0].mxu0
        %1754 = vmatprep.mubr.bf16.mxu0 0
        %1755 = vmatmul.mubr.bf16.gmra.mrb[0].mxu0 %v1569
        %v1756 = vpop.f32.mrb[0].mxu0
        %v1757 = vadd.f32 %v1650, %v1756
        %v1758 = vpop.f32.mrb[0].mxu0
        %v1759 = vpop.f32.mrb[0].mxu0
        %v1760 = vadd.f32 %v1653, %v1759
        %v1761 = vpop.f32.mrb[0].mxu0
        %1762 = vmatprep.mubr.bf16.mxu0 0
        %1763 = vmatmul.mubr.bf16.gmra.mrb[0].mxu0 %v1571
        %v1764 = vpop.f32.mrb[0].mxu0
        %v1765 = vadd.f32 %v1658, %v1764
        %v1766 = vpop.f32.mrb[0].mxu0
        %v1767 = vpop.f32.mrb[0].mxu0
        %v1768 = vadd.f32 %v1661, %v1767
        %v1769 = vpop.f32.mrb[0].mxu0
        %1770 = vmatprep.mubr.bf16.mxu0 0
        %1771 = vmatmul.mubr.bf16.gmra.mrb[0].mxu0 %v1573
        %v1772 = vpop.f32.mrb[0].mxu0
        %v1773 = vadd.f32 %v1666, %v1772
        %v1774 = vpop.f32.mrb[0].mxu0
        %v1775 = vpop.f32.mrb[0].mxu0
        %v1776 = vadd.f32 %v1669, %v1775
        %v1777 = vpop.f32.mrb[0].mxu0
        %1778 = vmatprep.mubr.bf16.mxu0 0
        %1779 = vmatmul.mubr.bf16.gmra.mrb[0].mxu0 %v1575
        %v1780 = vpop.f32.mrb[0].mxu0
        %v1781 = vadd.f32 %v1674, %v1780
        %v1782 = vpop.f32.mrb[0].mxu0
        %v1783 = vpop.f32.mrb[0].mxu0
        %v1784 = vadd.f32 %v1677, %v1783
        %v1785 = vpop.f32.mrb[0].mxu0
        %1786 = vdwg.mxu0
        %s1787 = scalar_lea.vmem %s5, 16
        %v1788 = vld [vmem:[%s1787] sm:$0xf]
        %v1789 = vld [vmem:[%s1787 + $0x4] sm:$0x3]
        %v1792 = vunpack.c.l.b16 %v1788
        %v1793 = vunpack.c.l.b16 %v1789
        %v1794 = vpack.c.b16 %v1793, %v1792
        %v1795 = vsel %vm1562, %v1551, 0
        %v1798 = vsel %vm1579, %v1794, 0
        %1800 = vmatprep.subr.bf16.mxu0 0
        %1801 = vmatpush1.bf16.msra.mxu0 %v1798
        %1802 = vmatprep.subr.bf16.mxu0 0
        %1803 = vmatpush1.bf16.msra.mxu0 0
        %1804 = vmatprep.subr.bf16.mxu0 0
        %1805 = vmatpush1.bf16.msra.mxu0 0
        %1806 = vmatprep.subr.bf16.mxu0 0
        %1807 = vmatpush1.bf16.msra.mxu0 0
        %1808 = vmatprep.subr.bf16.mxu0 0
        %1809 = vmatpush1.bf16.msra.mxu0 0
        %1810 = vmatprep.subr.bf16.mxu0 0
        %1811 = vmatpush1.bf16.msra.mxu0 0
        %1812 = vmatprep.subr.bf16.mxu0 0
        %1813 = vmatpush1.bf16.msra.mxu0 0
        %1814 = vmatprep.subr.bf16.mxu0 0
        %1815 = vmatpush1.bf16.msra.mxu0 0
        %1816 = vmatprep.subr.bf16.mxu0 0
        %1817 = vmatpush1.bf16.msra.mxu0 0
        %1818 = vmatprep.subr.bf16.mxu0 0
        %1819 = vmatpush1.bf16.msra.mxu0 0
        %1820 = vmatprep.subr.bf16.mxu0 0
        %1821 = vmatpush1.bf16.msra.mxu0 0
        %1822 = vmatprep.subr.bf16.mxu0 0
        %1823 = vmatpush1.bf16.msra.mxu0 0
        %1824 = vmatprep.subr.bf16.mxu0 0
        %1825 = vmatpush1.bf16.msra.mxu0 0
        %1826 = vmatprep.subr.bf16.mxu0 0
        %1827 = vmatpush1.bf16.msra.mxu0 0
        %1828 = vmatprep.subr.bf16.mxu0 0
        %1829 = vmatpush1.bf16.msra.mxu0 0
        %1830 = vmatprep.subr.bf16.mxu0 0
        %1831 = vmatpush1.bf16.msra.mxu0 0
        %1832 = vmatprep.mubr.bf16.mxu0 0
        %1833 = vmatmul.mubr.bf16.gmra.mrb[0].mxu0 %v1565
        %v1834 = vpop.f32.mrb[0].mxu0
        %v1835 = vadd.f32 0.0, %v1834
        %v1836 = vpop.f32.mrb[0].mxu0
        %v1837 = vpop.f32.mrb[0].mxu0
        %v1838 = vadd.f32 0.0, %v1837
        %v1839 = vpop.f32.mrb[0].mxu0
        %1840 = vmatprep.mubr.bf16.mxu0 0
        %1841 = vmatmul.mubr.bf16.gmra.mrb[0].mxu0 %v1567
        %v1842 = vpop.f32.mrb[0].mxu0
        %v1843 = vadd.f32 0.0, %v1842
        %v1844 = vpop.f32.mrb[0].mxu0
        %v1845 = vpop.f32.mrb[0].mxu0
        %v1846 = vadd.f32 0.0, %v1845
        %v1847 = vpop.f32.mrb[0].mxu0
        %1848 = vmatprep.mubr.bf16.mxu0 0
        %1849 = vmatmul.mubr.bf16.gmra.mrb[0].mxu0 %v1569
        %v1850 = vpop.f32.mrb[0].mxu0
        %v1851 = vadd.f32 0.0, %v1850
        %v1852 = vpop.f32.mrb[0].mxu0
        %v1853 = vpop.f32.mrb[0].mxu0
        %v1854 = vadd.f32 0.0, %v1853
        %v1855 = vpop.f32.mrb[0].mxu0
        %1856 = vmatprep.mubr.bf16.mxu0 0
        %1857 = vmatmul.mubr.bf16.gmra.mrb[0].mxu0 %v1571
        %v1858 = vpop.f32.mrb[0].mxu0
        %v1859 = vadd.f32 0.0, %v1858
        %v1860 = vpop.f32.mrb[0].mxu0
        %v1861 = vpop.f32.mrb[0].mxu0
        %v1862 = vadd.f32 0.0, %v1861
        %v1863 = vpop.f32.mrb[0].mxu0
        %1864 = vmatprep.mubr.bf16.mxu0 0
        %1865 = vmatmul.mubr.bf16.gmra.mrb[0].mxu0 %v1573
        %v1866 = vpop.f32.mrb[0].mxu0
        %v1867 = vadd.f32 0.0, %v1866
        %v1868 = vpop.f32.mrb[0].mxu0
        %v1869 = vpop.f32.mrb[0].mxu0
        %v1870 = vadd.f32 0.0, %v1869
        %v1871 = vpop.f32.mrb[0].mxu0
        %1872 = vmatprep.mubr.bf16.mxu0 0
        %1873 = vmatmul.mubr.bf16.gmra.mrb[0].mxu0 %v1575
        %v1874 = vpop.f32.mrb[0].mxu0
        %v1875 = vadd.f32 0.0, %v1874
        %v1876 = vpop.f32.mrb[0].mxu0
        %v1877 = vpop.f32.mrb[0].mxu0
        %v1878 = vadd.f32 0.0, %v1877
        %v1879 = vpop.f32.mrb[0].mxu0
        %1880 = vmatprep.mubr.bf16.mxu0 0
        %1881 = vmatmul.mubr.bf16.gmra.mrb[0].mxu0 %v1577
        %v1882 = vpop.f32.mrb[0].mxu0
        %v1883 = vadd.f32 0.0, %v1882
        %v1884 = vpop.f32.mrb[0].mxu0
        %v1885 = vpop.f32.mrb[0].mxu0
        %v1886 = vadd.f32 0.0, %v1885
        %v1887 = vpop.f32.mrb[0].mxu0
        %1888 = vmatprep.mubr.bf16.mxu0 0
        %1889 = vmatmul.mubr.bf16.gmra.mrb[0].mxu0 %v1795
        %v1890 = vpop.f32.mrb[0].mxu0
        %v1891 = vadd.f32 0.0, %v1890
        %v1892 = vpop.f32.mrb[0].mxu0
        %v1893 = vpop.f32.mrb[0].mxu0
        %v1894 = vadd.f32 0.0, %v1893
        %v1895 = vpop.f32.mrb[0].mxu0
        %1896 = vdwg.mxu0
        %v1897 = vadd.f32 %v1725, %v1835
        %v1898 = vadd.f32 %v1728, %v1838
        %v1899 = vadd.f32 %v1733, %v1843
        %v1900 = vadd.f32 %v1736, %v1846
        %v1901 = vadd.f32 %v1741, %v1851
        %v1902 = vadd.f32 %v1744, %v1854
        %v1903 = vadd.f32 %v1749, %v1859
        %v1904 = vadd.f32 %v1752, %v1862
        %v1905 = vadd.f32 %v1757, %v1867
        %v1906 = vadd.f32 %v1760, %v1870
        %v1907 = vadd.f32 %v1765, %v1875
        %v1908 = vadd.f32 %v1768, %v1878
        %v1909 = vadd.f32 %v1773, %v1883
        %v1910 = vadd.f32 %v1776, %v1886
        %v1911 = vadd.f32 %v1781, %v1891
        %v1912 = vadd.f32 %v1784, %v1894
        %v1913 = vld [vmem:[%s6] sm:$0x1]
        %v1915 = vlaneseq
        %v1916 = vshrl.u32 %v1915, 7
        %v1917 = vsub.s32 0, %v1916
        %v1918 = vrot.slane %v1913, %v1917
        %v1920 = vadd.f32 %v1897, %v1918
        %v1921 = vadd.f32 %v1898, %v1918
        %v1922 = vadd.f32 %v1899, %v1918
        %v1923 = vadd.f32 %v1900, %v1918
        %v1924 = vadd.f32 %v1901, %v1918
        %v1925 = vadd.f32 %v1902, %v1918
        %v1926 = vadd.f32 %v1903, %v1918
        %v1927 = vadd.f32 %v1904, %v1918
        %v1928 = vadd.f32 %v1905, %v1918
        %v1929 = vadd.f32 %v1906, %v1918
        %v1930 = vadd.f32 %v1907, %v1918
        %v1931 = vadd.f32 %v1908, %v1918
        %v1932 = vadd.f32 %v1909, %v1918
        %v1933 = vadd.f32 %v1910, %v1918
        %v1934 = vadd.f32 %v1911, %v1918
        %v1935 = vadd.f32 %v1912, %v1918
        %v1936 = vmax.f32 %v1920, 0.0
        %v1937 = vmax.f32 %v1921, 0.0
        %v1938 = vmax.f32 %v1922, 0.0
        %v1939 = vmax.f32 %v1923, 0.0
        %v1940 = vmax.f32 %v1924, 0.0
        %v1941 = vmax.f32 %v1925, 0.0
        %v1942 = vmax.f32 %v1926, 0.0
        %v1943 = vmax.f32 %v1927, 0.0
        %v1944 = vmax.f32 %v1928, 0.0
        %v1945 = vmax.f32 %v1929, 0.0
        %v1946 = vmax.f32 %v1930, 0.0
        %v1947 = vmax.f32 %v1931, 0.0
        %v1948 = vmax.f32 %v1932, 0.0
        %v1949 = vmax.f32 %v1933, 0.0
        %v1950 = vmax.f32 %v1934, 0.0
        %v1951 = vmax.f32 %v1935, 0.0
        %v1952 = vpack.c.bf16 %v1937, %v1936
        %v1953 = vpack.c.bf16 %v1939, %v1938
        %v1954 = vpack.c.bf16 %v1941, %v1940
        %v1955 = vpack.c.bf16 %v1943, %v1942
        %v1956 = vpack.c.bf16 %v1945, %v1944
        %v1957 = vpack.c.bf16 %v1947, %v1946
        %v1958 = vpack.c.bf16 %v1949, %v1948
        %v1959 = vpack.c.bf16 %v1951, %v1950
        %v1960 = vld [vmem:[%s7] sm:$0x3]
        %v1961 = vld [vmem:[%s8] sm:$0x1]
        %v1963 = vlaneseq
        %v1964 = vshrl.u32 %v1963, 7
        %v1965 = vsub.s32 0, %v1964
        %v1966 = vrot.slane %v1961, %v1965
        %v1969 = vsel %vm1500, %v1952, 0
        %v1972 = vsel %vm1500, %v1953, 0
        %v1975 = vsel %vm1500, %v1954, 0
        %v1978 = vsel %vm1500, %v1955, 0
        %v1981 = vsel %vm1500, %v1956, 0
        %v1984 = vsel %vm1500, %v1957, 0
        %v1987 = vsel %vm1500, %v1958, 0
        %v1990 = vsel %vm1500, %v1959, 0
        %vm1992 = vcmask 1041408
        %v1994 = vsel %vm1992, %v1960, 0
        %1996 = vmatprep.subr.bf16.mxu0 0
        %1997 = vmatpush1.bf16.msra.mxu0 %v1994
        %1998 = vmatprep.subr.bf16.mxu0 0
        %1999 = vmatpush1.bf16.msra.mxu0 0
        %2000 = vmatprep.subr.bf16.mxu0 0
        %2001 = vmatpush1.bf16.msra.mxu0 0
        %2002 = vmatprep.subr.bf16.mxu0 0
        %2003 = vmatpush1.bf16.msra.mxu0 0
        %2004 = vmatprep.subr.bf16.mxu0 0
        %2005 = vmatpush1.bf16.msra.mxu0 0
        %2006 = vmatprep.subr.bf16.mxu0 0
        %2007 = vmatpush1.bf16.msra.mxu0 0
        %2008 = vmatprep.subr.bf16.mxu0 0
        %2009 = vmatpush1.bf16.msra.mxu0 0
        %2010 = vmatprep.subr.bf16.mxu0 0
        %2011 = vmatpush1.bf16.msra.mxu0 0
        %2012 = vmatprep.subr.bf16.mxu0 0
        %2013 = vmatpush1.bf16.msra.mxu0 0
        %2014 = vmatprep.subr.bf16.mxu0 0
        %2015 = vmatpush1.bf16.msra.mxu0 0
        %2016 = vmatprep.subr.bf16.mxu0 0
        %2017 = vmatpush1.bf16.msra.mxu0 0
        %2018 = vmatprep.subr.bf16.mxu0 0
        %2019 = vmatpush1.bf16.msra.mxu0 0
        %2020 = vmatprep.subr.bf16.mxu0 0
        %2021 = vmatpush1.bf16.msra.mxu0 0
        %2022 = vmatprep.subr.bf16.mxu0 0
        %2023 = vmatpush1.bf16.msra.mxu0 0
        %2024 = vmatprep.subr.bf16.mxu0 0
        %2025 = vmatpush1.bf16.msra.mxu0 0
        %2026 = vmatprep.subr.bf16.mxu0 0
        %2027 = vmatpush1.bf16.msra.mxu0 0
        %2028 = vmatprep.mubr.bf16.mxu0 0
        %2029 = vmatmul.mubr.bf16.gmra.mrb[0].mxu0 %v1969
        %v2030 = vpop.f32.mrb[0].mxu0
        %v2031 = vadd.f32 %v1966, %v2030
        %v2032 = vpop.f32.mrb[0].mxu0
        %v2033 = vpop.f32.mrb[0].mxu0
        %v2034 = vadd.f32 %v1966, %v2033
        %v2035 = vpop.f32.mrb[0].mxu0
        %2036 = vmatprep.mubr.bf16.mxu0 0
        %2037 = vmatmul.mubr.bf16.gmra.mrb[0].mxu0 %v1972
        %v2038 = vpop.f32.mrb[0].mxu0
        %v2039 = vadd.f32 %v1966, %v2038
        %v2040 = vpop.f32.mrb[0].mxu0
        %v2041 = vpop.f32.mrb[0].mxu0
        %v2042 = vadd.f32 %v1966, %v2041
        %v2043 = vpop.f32.mrb[0].mxu0
        %2044 = vmatprep.mubr.bf16.mxu0 0
        %2045 = vmatmul.mubr.bf16.gmra.mrb[0].mxu0 %v1975
        %v2046 = vpop.f32.mrb[0].mxu0
        %v2047 = vadd.f32 %v1966, %v2046
        %v2048 = vpop.f32.mrb[0].mxu0
        %v2049 = vpop.f32.mrb[0].mxu0
        %v2050 = vadd.f32 %v1966, %v2049
        %v2051 = vpop.f32.mrb[0].mxu0
        %2052 = vmatprep.mubr.bf16.mxu0 0
        %2053 = vmatmul.mubr.bf16.gmra.mrb[0].mxu0 %v1978
        %v2054 = vpop.f32.mrb[0].mxu0
        %v2055 = vadd.f32 %v1966, %v2054
        %v2056 = vpop.f32.mrb[0].mxu0
        %v2057 = vpop.f32.mrb[0].mxu0
        %v2058 = vadd.f32 %v1966, %v2057
        %v2059 = vpop.f32.mrb[0].mxu0
        %2060 = vmatprep.mubr.bf16.mxu0 0
        %2061 = vmatmul.mubr.bf16.gmra.mrb[0].mxu0 %v1981
        %v2062 = vpop.f32.mrb[0].mxu0
        %v2063 = vadd.f32 %v1966, %v2062
        %v2064 = vpop.f32.mrb[0].mxu0
        %v2065 = vpop.f32.mrb[0].mxu0
        %v2066 = vadd.f32 %v1966, %v2065
        %v2067 = vpop.f32.mrb[0].mxu0
        %2068 = vmatprep.mubr.bf16.mxu0 0
        %2069 = vmatmul.mubr.bf16.gmra.mrb[0].mxu0 %v1984
        %v2070 = vpop.f32.mrb[0].mxu0
        %v2071 = vadd.f32 %v1966, %v2070
        %v2072 = vpop.f32.mrb[0].mxu0
        %v2073 = vpop.f32.mrb[0].mxu0
        %v2074 = vadd.f32 %v1966, %v2073
        %v2075 = vpop.f32.mrb[0].mxu0
        %2076 = vmatprep.mubr.bf16.mxu0 0
        %2077 = vmatmul.mubr.bf16.gmra.mrb[0].mxu0 %v1987
        %v2078 = vpop.f32.mrb[0].mxu0
        %v2079 = vadd.f32 %v1966, %v2078
        %v2080 = vpop.f32.mrb[0].mxu0
        %v2081 = vpop.f32.mrb[0].mxu0
        %v2082 = vadd.f32 %v1966, %v2081
        %v2083 = vpop.f32.mrb[0].mxu0
        %2084 = vmatprep.mubr.bf16.mxu0 0
        %2085 = vmatmul.mubr.bf16.gmra.mrb[0].mxu0 %v1990
        %v2086 = vpop.f32.mrb[0].mxu0
        %v2087 = vadd.f32 %v1966, %v2086
        %v2088 = vpop.f32.mrb[0].mxu0
        %v2089 = vpop.f32.mrb[0].mxu0
        %v2090 = vadd.f32 %v1966, %v2089
        %v2091 = vpop.f32.mrb[0].mxu0
        %2092 = vdwg.mxu0
        %v2093 = vunpack.c.l.bf16 %v492
        %v2094 = vunpack.c.l.bf16 %v493
        %v2095 = vunpack.c.l.bf16 %v494
        %v2096 = vunpack.c.l.bf16 %v495
        %v2097 = vunpack.c.l.bf16 %v496
        %v2098 = vunpack.c.l.bf16 %v497
        %v2099 = vunpack.c.l.bf16 %v498
        %v2100 = vunpack.c.l.bf16 %v499
        %v2101 = vunpack.c.l.bf16 %v500
        %v2102 = vunpack.c.l.bf16 %v501
        %v2103 = vunpack.c.l.bf16 %v502
        %v2104 = vunpack.c.l.bf16 %v503
        %v2105 = vunpack.c.l.bf16 %v504
        %v2106 = vunpack.c.l.bf16 %v505
        %v2107 = vunpack.c.l.bf16 %v506
        %v2108 = vunpack.c.l.bf16 %v507
        %v2109 = vadd.f32 %v2031, %v2093
        %v2110 = vadd.f32 %v2034, %v2094
        %v2111 = vadd.f32 %v2039, %v2095
        %v2112 = vadd.f32 %v2042, %v2096
        %v2113 = vadd.f32 %v2047, %v2097
        %v2114 = vadd.f32 %v2050, %v2098
        %v2115 = vadd.f32 %v2055, %v2099
        %v2116 = vadd.f32 %v2058, %v2100
        %v2117 = vadd.f32 %v2063, %v2101
        %v2118 = vadd.f32 %v2066, %v2102
        %v2119 = vadd.f32 %v2071, %v2103
        %v2120 = vadd.f32 %v2074, %v2104
        %v2121 = vadd.f32 %v2079, %v2105
        %v2122 = vadd.f32 %v2082, %v2106
        %v2123 = vadd.f32 %v2087, %v2107
        %v2124 = vadd.f32 %v2090, %v2108
        %v2125 = vmax.f32 %v2109, 0.0
        %v2126 = vmax.f32 %v2110, 0.0
        %v2127 = vmax.f32 %v2111, 0.0
        %v2128 = vmax.f32 %v2112, 0.0
        %v2129 = vmax.f32 %v2113, 0.0
        %v2130 = vmax.f32 %v2114, 0.0
        %v2131 = vmax.f32 %v2115, 0.0
        %v2132 = vmax.f32 %v2116, 0.0
        %v2133 = vmax.f32 %v2117, 0.0
        %v2134 = vmax.f32 %v2118, 0.0
        %v2135 = vmax.f32 %v2119, 0.0
        %v2136 = vmax.f32 %v2120, 0.0
        %v2137 = vmax.f32 %v2121, 0.0
        %v2138 = vmax.f32 %v2122, 0.0
        %v2139 = vmax.f32 %v2123, 0.0
        %v2140 = vmax.f32 %v2124, 0.0
        %v2141 = vpack.c.bf16 %v2126, %v2125
        %v2142 = vpack.c.bf16 %v2128, %v2127
        %v2143 = vpack.c.bf16 %v2130, %v2129
        %v2144 = vpack.c.bf16 %v2132, %v2131
        %v2145 = vpack.c.bf16 %v2134, %v2133
        %v2146 = vpack.c.bf16 %v2136, %v2135
        %v2147 = vpack.c.bf16 %v2138, %v2137
        %v2148 = vpack.c.bf16 %v2140, %v2139
        %v2157 = vunpack.c.l.b16 %v2141
        %v2158 = vunpack.c.h.b16 %v2141
        %v2159 = vunpack.c.l.b16 %v2142
        %v2160 = vunpack.c.h.b16 %v2142
        %v2161 = vunpack.c.l.b16 %v2143
        %v2162 = vunpack.c.h.b16 %v2143
        %v2163 = vunpack.c.l.b16 %v2144
        %v2164 = vunpack.c.h.b16 %v2144
        %v2165 = vunpack.c.l.b16 %v2145
        %v2166 = vunpack.c.h.b16 %v2145
        %v2167 = vunpack.c.l.b16 %v2146
        %v2168 = vunpack.c.h.b16 %v2146
        %v2169 = vunpack.c.l.b16 %v2147
        %v2170 = vunpack.c.h.b16 %v2147
        %v2171 = vunpack.c.l.b16 %v2148
        %v2172 = vunpack.c.h.b16 %v2148
        %v2173 = vpack.c.b16 %v2157, %v2157
        %v2174 = vpack.c.b16 %v2158, %v2158
        %v2175 = vpack.c.b16 %v2159, %v2159
        %v2176 = vpack.c.b16 %v2160, %v2160
        %v2177 = vpack.c.b16 %v2161, %v2161
        %v2178 = vpack.c.b16 %v2162, %v2162
        %v2179 = vpack.c.b16 %v2163, %v2163
        %v2180 = vpack.c.b16 %v2164, %v2164
        %v2181 = vpack.c.b16 %v2165, %v2165
        %v2182 = vpack.c.b16 %v2166, %v2166
        %v2183 = vpack.c.b16 %v2167, %v2167
        %v2184 = vpack.c.b16 %v2168, %v2168
        %v2185 = vpack.c.b16 %v2169, %v2169
        %v2186 = vpack.c.b16 %v2170, %v2170
        %v2187 = vpack.c.b16 %v2171, %v2171
        %v2188 = vpack.c.b16 %v2172, %v2172
        %vm2205 = vcmask 125952
        %2206 = vst.msk [vmem:[%s478] sm:$0xf] %vm2205, %v2173
        %2207 = vst.msk [vmem:[%s478 + $0x4] sm:$0xf] %vm2205, %v2174
        %2208 = vst.msk [vmem:[%s478 + $0x8] sm:$0xf] %vm2205, %v2175
        %2209 = vst.msk [vmem:[%s478 + $0xc] sm:$0xf] %vm2205, %v2176
        %2210 = vst.msk [vmem:[%s478 + $0x10] sm:$0xf] %vm2205, %v2177
        %2211 = vst.msk [vmem:[%s478 + $0x14] sm:$0xf] %vm2205, %v2178
        %2212 = vst.msk [vmem:[%s478 + $0x18] sm:$0xf] %vm2205, %v2179
        %2213 = vst.msk [vmem:[%s478 + $0x1c] sm:$0xf] %vm2205, %v2180
        %2214 = vst.msk [vmem:[%s478 + $0x20] sm:$0xf] %vm2205, %v2181
        %2215 = vst.msk [vmem:[%s478 + $0x24] sm:$0xf] %vm2205, %v2182
        %2216 = vst.msk [vmem:[%s478 + $0x28] sm:$0xf] %vm2205, %v2183
        %2217 = vst.msk [vmem:[%s478 + $0x2c] sm:$0xf] %vm2205, %v2184
        %2218 = vst.msk [vmem:[%s478 + $0x30] sm:$0xf] %vm2205, %v2185
        %2219 = vst.msk [vmem:[%s478 + $0x34] sm:$0xf] %vm2205, %v2186
        %2220 = vst.msk [vmem:[%s478 + $0x38] sm:$0xf] %vm2205, %v2187
        %2221 = vst.msk [vmem:[%s478 + $0x3c] sm:$0xf] %vm2205, %v2188
        %s2222 = sand.u32 %s277, 1
        %s2223 = scalar_lea.sflag [#allocation4], %s2222
        %s2224 = sand.u32 %s277, 1
        %s2225 = smul.addr %s2224, 64
        %s2226 = scalar_lea.vmem [#allocation8], %s2225
        // Predicated region
        $region69: #{tpu_custom_call.1} parent=55 // pred_check
          %p2227 = pneg %p287
        $region70: #{tpu_custom_call.1} parent=55 // pred_check_branch
          %2229 = sbr.rel (%p2227) target = $region72
        $region71: #{tpu_custom_call.1} parent=55 // pred_region
          %s2230 = smul.u32 8, %s34
          %s2232 = ssub.s32 1024, 1024
          %2233 = vsyncadd %s2223, %s2232
          %s2234 = smul.addr %s2230, 2
          %s2235 = smul.addr %s33, 32
          %s2236 = sadd.s32 %s2234, %s2235
          %s2237 = smul.addr %s2236, 64
          %s2238 = scalar_lea.hbm %s9, %s2237
          %s2239 = sshll.u32 %s2226, 4
          %s2240 = int_to_ptr.vmem [resolvable:$true] %s2239
          %2245 = dma.vmem_to_hbm [thread:$0]  %s2240, 1024, %s2238, %s2223, 64, 64, 4
        $region72: #{tpu_custom_call.1} parent=55 // pred_fallthru
          _
      $region56: #{tpu_custom_call.1} parent=5 // pred_fallthru
        _
      %p2246 = scmp.le.s32.totalorder 2, %s24
      // Predicated region
      $region73: #{tpu_custom_call.1} parent=5 // pred_check
        %p2247 = pneg %p2246
      $region74: #{tpu_custom_call.1} parent=5 // pred_check_branch
        %2249 = sbr.rel (%p2247) target = $region76
      $region75: #{tpu_custom_call.1} parent=5 // pred_region
        %s2250 = ssub.s32 %s24, 2
        // Predicated region
        $region77: #{tpu_custom_call.1} parent=75 // pred_check
          %p2251 = pneg %p293
        $region78: #{tpu_custom_call.1} parent=75 // pred_check_branch
          %2253 = sbr.rel (%p2251) target = $region80
        $region79: #{tpu_custom_call.1} parent=75 // pred_region
          %s2254 = sand.u32 %s278, 1
          %s2255 = scalar_lea.sflag [#allocation4], %s2254
          %s2256 = sand.u32 %s278, 1
          %s2257 = smul.addr %s2256, 64
          %s2258 = scalar_lea.vmem [#allocation8], %s2257
          %2259 = dma.done %s2255, 1024
        $region80: #{tpu_custom_call.1} parent=75 // pred_fallthru
          _
      $region76: #{tpu_custom_call.1} parent=5 // pred_fallthru
        _
    $region6: #{tpu_custom_call.1} parent=1 // loop_footer
      %s28 = sadd.s32 1, %s24
    $region7: #{tpu_custom_call.1} parent=1 // loop_footer_branch
      %23 = sbr.rel target = $region3
    $region8: #{tpu_custom_call.1} parent=1 // loop_exit
      _
    %2260 = vsyncpa [#allocation3], 1
    %s2261 = scalar_lea.sflag [#allocation3], 1
    %2262 = vsyncpa %s2261, 1
    %2263 = vsyncpa [#allocation6], 1
    %s2264 = scalar_lea.sflag [#allocation6], 1
    %2265 = vsyncpa %s2264, 1
    %2266 = vsyncpa [#allocation4], 1
    %s2267 = scalar_lea.sflag [#allocation4], 1
    %2268 = vsyncpa %s2267, 1

</llo_original>
